<compile_context>
chip_gen: v5e
topology: v5e:2x2
jax: 0.10.0
libtpu: 0.0.40
codegen_flags: <defaults>
</compile_context>

<pallas_src>
import numpy as np
import jax
import jax.numpy as jnp
from jax.experimental import pallas as pl
from jax.experimental.pallas import tpu as pltpu


def _roi_pool_kernel(bidx_ref, hs_ref, he_ref, ws_ref, we_ref,  # scalar prefetch (SMEM, 1-D)
                     x_ref,                                     # (1, H, W, TC)  VMEM
                     out_ref):                                  # (1, PH, PW, TC) VMEM
    n = pl.program_id(1)                       # ROI index (innermost grid axis)
    _, H, W, TC = x_ref.shape
    _, PH, PW, _ = out_ref.shape

    neg = jnp.asarray(jnp.finfo(x_ref.dtype).min, dtype=x_ref.dtype)
    h_ids = jax.lax.broadcasted_iota(jnp.int32, (H, 1, 1), 0)
    w_ids = jax.lax.broadcasted_iota(jnp.int32, (W, 1), 0)

    for ph in range(PH):                       # PH, PW are small; unrolled
        hstart = hs_ref[n * PH + ph]
        hend = he_ref[n * PH + ph]
        hmask = (h_ids >= hstart) & (h_ids < hend)                  # (H, 1, 1)
        # Separable step 1: h-masked max over the full map -> (W, TC).
        row = jnp.max(jnp.where(hmask, x_ref[0], neg), axis=0)
        for pw in range(PW):
            wstart = ws_ref[n * PW + pw]
            wend = we_ref[n * PW + pw]
            wmask = (w_ids >= wstart) & (w_ids < wend)              # (W, 1)
            # Separable step 2: w-masked max over the small intermediate.
            m = jnp.max(jnp.where(wmask, row, neg), axis=0)         # (TC,)
            is_empty = jnp.logical_or(hend <= hstart, wend <= wstart)
            m = jnp.where(is_empty, jnp.zeros_like(m), m)           # empty bin -> 0
            out_ref[0, ph, pw, :] = m.astype(out_ref.dtype)         # direct per-bin store
    # TODO(synk): argmax_data (only needed for the custom backward) is not produced.


def roi_pooling_2d(x_nchw, roi_indice_and_roi, pooled_h, pooled_w, spatial_scale):
    rois = roi_indice_and_roi.astype(jnp.float32)
    B, C, H, W = x_nchw.shape
    N = rois.shape[0]
    PH, PW = int(pooled_h), int(pooled_w)
    dtype = x_nchw.dtype
    itemsize = jnp.dtype(dtype).itemsize

    # NCHW -> NHWC so channels sit on the 128-lane axis.
    # TODO(synk): if the upstream producer can emit NHWC directly, pass it through and skip this.
    x_nhwc = jnp.transpose(x_nchw, (0, 2, 3, 1))                    # (B, H, W, C)

    # Pad channels to a multiple of 128 for lane-dense (unmasked) vld/vst.
    C_pad = ((C + 127) // 128) * 128
    if C_pad != C:
        x_nhwc = jnp.pad(x_nhwc, ((0, 0), (0, 0), (0, 0), (0, C_pad - C)))

    # Channel tile: largest multiple of 128 dividing C_pad whose block fits the budget.
    block_budget = 20 * 1024 * 1024                                 # bytes per input block
    TC = C_pad
    while TC > 128 and H * W * TC * itemsize > block_budget:
        cand = TC - 128
        while cand > 128 and C_pad % cand != 0:
            cand -= 128
        TC = cand
    num_cb = C_pad // TC

    # ---- glue: integer bin boundaries per ROI (matches the CUDA kernel math) ----
    batch_idx = rois[:, 0].astype(jnp.int32)
    # round-half-away-from-zero on non-negative coords == CUDA round()
    roi_start_w = jnp.floor(rois[:, 1] * spatial_scale + 0.5).astype(jnp.int32)
    roi_start_h = jnp.floor(rois[:, 2] * spatial_scale + 0.5).astype(jnp.int32)
    roi_end_w = jnp.floor(rois[:, 3] * spatial_scale + 0.5).astype(jnp.int32)
    roi_end_h = jnp.floor(rois[:, 4] * spatial_scale + 0.5).astype(jnp.int32)
    roi_w = jnp.maximum(roi_end_w - roi_start_w + 1, 1).astype(jnp.float32)
    roi_h = jnp.maximum(roi_end_h - roi_start_h + 1, 1).astype(jnp.float32)
    bin_h = roi_h / PH
    bin_w = roi_w / PW

    ph = jnp.arange(PH, dtype=jnp.float32)
    pw = jnp.arange(PW, dtype=jnp.float32)
    hstart = jnp.floor(ph[None, :] * bin_h[:, None]).astype(jnp.int32) + roi_start_h[:, None]
    hend = jnp.ceil((ph[None, :] + 1.0) * bin_h[:, None]).astype(jnp.int32) + roi_start_h[:, None]
    wstart = jnp.floor(pw[None, :] * bin_w[:, None]).astype(jnp.int32) + roi_start_w[:, None]
    wend = jnp.ceil((pw[None, :] + 1.0) * bin_w[:, None]).astype(jnp.int32) + roi_start_w[:, None]
    hstart = jnp.clip(hstart, 0, H)
    hend = jnp.clip(hend, 0, H)
    wstart = jnp.clip(wstart, 0, W)
    wend = jnp.clip(wend, 0, W)

    # Sort ROIs by batch index so consecutive grid steps reuse the same x block
    # (Pallas only re-DMAs when the block index changes).
    order = jnp.argsort(batch_idx)
    inv_order = jnp.argsort(order)
    batch_idx_s = batch_idx[order]
    hstart_s = hstart[order].reshape(-1)     # (N*PH,)  1-D -> tiny SMEM footprint
    hend_s = hend[order].reshape(-1)
    wstart_s = wstart[order].reshape(-1)     # (N*PW,)
    wend_s = wend[order].reshape(-1)

    in_block_bytes = H * W * TC * itemsize
    out_block_bytes = PH * PW * TC * itemsize
    vmem_limit = int(min(max(2 * (in_block_bytes + out_block_bytes) + (4 << 20),
                             16 << 20), 96 << 20))

    grid_spec = pltpu.PrefetchScalarGridSpec(
        num_scalar_prefetch=5,
        grid=(num_cb, N),                    # ROI axis innermost -> x block stays resident
        in_specs=[
            pl.BlockSpec((1, H, W, TC),
                         lambda c, n, bidx, hs, he, ws, we: (bidx[n], 0, 0, c)),
        ],
        out_specs=pl.BlockSpec((1, PH, PW, TC),
                               lambda c, n, bidx, hs, he, ws, we: (n, 0, 0, c)),
    )

    out_sorted = pl.pallas_call(
        _roi_pool_kernel,
        out_shape=jax.ShapeDtypeStruct((N, PH, PW, C_pad), dtype),
        grid_spec=grid_spec,
        compiler_params=pltpu.CompilerParams(
            dimension_semantics=("arbitrary", "parallel"),
            vmem_limit_bytes=vmem_limit,
        ),
    )(batch_idx_s, hstart_s, hend_s, wstart_s, wend_s, x_nhwc)

    out_nhwc = out_sorted[inv_order][..., :C]                       # undo sort, drop channel pad
    return jnp.transpose(out_nhwc, (0, 3, 1, 2))                    # (N, C, PH, PW)


class RoIPooling2D:
    """JAX/Pallas mirror of the PyTorch RoIPooling2D module (forward only)."""

    def __init__(self, h, w, spatial_scale):
        self.h = h
        self.w = w
        self.spatial_scale = spatial_scale

    def __call__(self, x, roi_indice_and_roi):
        return roi_pooling_2d(x, roi_indice_and_roi, self.h, self.w, self.spatial_scale)


def _roi_pool_reference(x, rois, PH, PW, scale):
    """Pure numpy re-implementation of the CUDA roi_forward kernel."""
    x = np.asarray(x, np.float32)
    rois = np.asarray(rois, np.float32)
    _, C, H, W = x.shape
    N = rois.shape[0]
    out = np.zeros((N, C, PH, PW), np.float32)
    for n in range(N):
        bidx = int(rois[n, 0])
        rsw = int(np.floor(rois[n, 1] * scale + 0.5))
        rsh = int(np.floor(rois[n, 2] * scale + 0.5))
        rew = int(np.floor(rois[n, 3] * scale + 0.5))
        reh = int(np.floor(rois[n, 4] * scale + 0.5))
        rw = max(rew - rsw + 1, 1)
        rh = max(reh - rsh + 1, 1)
        bh = rh / float(PH)
        bw = rw / float(PW)
        for ph in range(PH):
            hstart = min(max(int(np.floor(ph * bh)) + rsh, 0), H)
            hend = min(max(int(np.ceil((ph + 1) * bh)) + rsh, 0), H)
            for pw in range(PW):
                wstart = min(max(int(np.floor(pw * bw)) + rsw, 0), W)
                wend = min(max(int(np.ceil((pw + 1) * bw)) + rsw, 0), W)
                if hend <= hstart or wend <= wstart:
                    out[n, :, ph, pw] = 0.0
                else:
                    out[n, :, ph, pw] = x[bidx, :, hstart:hend, wstart:wend].max(axis=(1, 2))
    return out


if __name__ == "__main__":
    key = jax.random.PRNGKey(0)
    k1, k2, k3, k4 = jax.random.split(key, 4)

    B, C, H, W = 2, 8, 16, 16
    pooled_h, pooled_w = 4, 4
    spatial_scale = 0.25          # feature stride 4 -> image coords up to ~64

    x = jax.random.normal(k1, (B, C, H, W), dtype=jnp.float32)

    n_rois = 6
    batch_idx = jax.random.randint(k2, (n_rois,), 0, B).astype(jnp.float32)
    xs = jnp.sort(jax.random.uniform(k3, (n_rois, 2), minval=0.0, maxval=60.0), axis=1)
    ys = jnp.sort(jax.random.uniform(k4, (n_rois, 2), minval=0.0, maxval=60.0), axis=1)
    rois = jnp.stack([batch_idx, xs[:, 0], ys[:, 0], xs[:, 1], ys[:, 1]], axis=1)

    module = RoIPooling2D(pooled_h, pooled_w, spatial_scale)
    out = module(x, rois)
    out = jax.block_until_ready(out)

    ref = _roi_pool_reference(np.asarray(x), np.asarray(rois),
                              pooled_h, pooled_w, spatial_scale)
    np.testing.assert_allclose(np.asarray(out), ref, rtol=1e-5, atol=1e-5)
    print("KERNEL_OK")
</pallas_src>

<mosaic_0001>
module attributes {stable_mosaic.version = 11 : i64} {
  func.func @_roi_pool_kernel(%arg0: i32, %arg1: i32, %arg2: memref<6xi32, #tpu.memory_space<smem>>, %arg3: memref<24xi32, #tpu.memory_space<smem>>, %arg4: memref<24xi32, #tpu.memory_space<smem>>, %arg5: memref<24xi32, #tpu.memory_space<smem>>, %arg6: memref<24xi32, #tpu.memory_space<smem>>, %arg7: memref<1x16x16x128xf32, #tpu.memory_space<vmem>>, %arg8: memref<1x4x4x128xf32, #tpu.memory_space<vmem>>) attributes {dimension_semantics = [#tpu.dimension_semantics<arbitrary>, #tpu.dimension_semantics<parallel>], iteration_bounds = array<i64: 1, 6>, scalar_prefetch = 5 : i64, scratch_operands = 0 : i64, tpu.core_type = #tpu.core_type<tc>, window_params = [{transform_indices = @transform_0, window_bounds = array<i64: 1, 16, 16, 128>}, {transform_indices = @transform_1, window_bounds = array<i64: 1, 4, 4, 128>}]} {
    %0 = tpu.iota {dimensions = array<i32: 0>} : vector<16x1x1xi32>
    %1 = tpu.iota {dimensions = array<i32: 0>} : vector<16x1xi32>
    %c4_i32 = arith.constant 4 : i32
    %2 = arith.muli %arg1, %c4_i32 : i32
    %c0_i32 = arith.constant 0 : i32
    %3 = arith.addi %2, %c0_i32 : i32
    %4 = arith.index_cast %3 : i32 to index
    %5 = memref.load %arg3[%4] : memref<24xi32, #tpu.memory_space<smem>>
    %c4_i32_0 = arith.constant 4 : i32
    %6 = arith.muli %arg1, %c4_i32_0 : i32
    %c0_i32_1 = arith.constant 0 : i32
    %7 = arith.addi %6, %c0_i32_1 : i32
    %8 = arith.index_cast %7 : i32 to index
    %9 = memref.load %arg4[%8] : memref<24xi32, #tpu.memory_space<smem>>
    %10 = vector.broadcast %5 : i32 to vector<16x1x1xi32>
    %11 = arith.cmpi sge, %0, %10 : vector<16x1x1xi32>
    %12 = vector.broadcast %9 : i32 to vector<16x1x1xi32>
    %13 = arith.cmpi slt, %0, %12 : vector<16x1x1xi32>
    %14 = arith.andi %11, %13 : vector<16x1x1xi1>
    %c0 = arith.constant 0 : index
    %c0_2 = arith.constant 0 : index
    %c0_3 = arith.constant 0 : index
    %c0_4 = arith.constant 0 : index
    %15 = vector.load %arg7[%c0, %c0_2, %c0_3, %c0_4] : memref<1x16x16x128xf32, #tpu.memory_space<vmem>>, vector<1x16x16x128xf32>
    %16 = vector.shape_cast %15 : vector<1x16x16x128xf32> to vector<16x16x128xf32>
    %cst = arith.constant -3.40282347E+38 : f32
    %17 = vector.shape_cast %14 : vector<16x1x1xi1> to vector<16x1x1xi1>
    %18 = vector.broadcast %17 : vector<16x1x1xi1> to vector<16x16x128xi1>
    %19 = vector.broadcast %cst : f32 to vector<16x16x128xf32>
    %20 = arith.select %18, %16, %19 : vector<16x16x128xi1>, vector<16x16x128xf32>
    %cst_5 = arith.constant dense<0xFF800000> : vector<16x128xf32>
    %21 = vector.multi_reduction <maximumf>, %20, %cst_5 [0] : vector<16x16x128xf32> to vector<16x128xf32>
    %c4_i32_6 = arith.constant 4 : i32
    %22 = arith.muli %arg1, %c4_i32_6 : i32
    %c0_i32_7 = arith.constant 0 : i32
    %23 = arith.addi %22, %c0_i32_7 : i32
    %24 = arith.index_cast %23 : i32 to index
    %25 = memref.load %arg5[%24] : memref<24xi32, #tpu.memory_space<smem>>
    %c4_i32_8 = arith.constant 4 : i32
    %26 = arith.muli %arg1, %c4_i32_8 : i32
    %c0_i32_9 = arith.constant 0 : i32
    %27 = arith.addi %26, %c0_i32_9 : i32
    %28 = arith.index_cast %27 : i32 to index
    %29 = memref.load %arg6[%28] : memref<24xi32, #tpu.memory_space<smem>>
    %30 = vector.broadcast %25 : i32 to vector<16x1xi32>
    %31 = arith.cmpi sge, %1, %30 : vector<16x1xi32>
    %32 = vector.broadcast %29 : i32 to vector<16x1xi32>
    %33 = arith.cmpi slt, %1, %32 : vector<16x1xi32>
    %34 = arith.andi %31, %33 : vector<16x1xi1>
    %cst_10 = arith.constant -3.40282347E+38 : f32
    %35 = vector.shape_cast %34 : vector<16x1xi1> to vector<16x1xi1>
    %36 = vector.broadcast %35 : vector<16x1xi1> to vector<16x128xi1>
    %37 = vector.broadcast %cst_10 : f32 to vector<16x128xf32>
    %38 = arith.select %36, %21, %37 : vector<16x128xi1>, vector<16x128xf32>
    %cst_11 = arith.constant dense<0xFF800000> : vector<128xf32>
    %39 = vector.multi_reduction <maximumf>, %38, %cst_11 [0] : vector<16x128xf32> to vector<128xf32>
    %40 = arith.cmpi sle, %9, %5 : i32
    %41 = arith.cmpi sle, %29, %25 : i32
    %42 = arith.ori %40, %41 : i1
    %cst_12 = arith.constant 0.000000e+00 : f32
    %43 = vector.broadcast %cst_12 : f32 to vector<128xf32>
    %44 = arith.select %42, %43, %39 : vector<128xf32>
    %c0_13 = arith.constant 0 : index
    %c0_14 = arith.constant 0 : index
    %c0_15 = arith.constant 0 : index
    %c0_16 = arith.constant 0 : index
    %45 = vector.load %arg8[%c0_13, %c0_14, %c0_15, %c0_16] : memref<1x4x4x128xf32, #tpu.memory_space<vmem>>, vector<1x1x1x128xf32>
    %46 = vector.shape_cast %45 : vector<1x1x1x128xf32> to vector<128xf32>
    %47 = vector.shape_cast %44 : vector<128xf32> to vector<1x1x1x128xf32>
    tpu.vector_store %arg8[%c0_13, %c0_14, %c0_15, %c0_16], %47 {strides = array<i32>} : memref<1x4x4x128xf32, #tpu.memory_space<vmem>>, vector<1x1x1x128xf32>,
    %c4_i32_17 = arith.constant 4 : i32
    %48 = arith.muli %arg1, %c4_i32_17 : i32
    %c1_i32 = arith.constant 1 : i32
    %49 = arith.addi %48, %c1_i32 : i32
    %50 = arith.index_cast %49 : i32 to index
    %51 = memref.load %arg5[%50] : memref<24xi32, #tpu.memory_space<smem>>
    %c4_i32_18 = arith.constant 4 : i32
    %52 = arith.muli %arg1, %c4_i32_18 : i32
    %c1_i32_19 = arith.constant 1 : i32
    %53 = arith.addi %52, %c1_i32_19 : i32
    %54 = arith.index_cast %53 : i32 to index
    %55 = memref.load %arg6[%54] : memref<24xi32, #tpu.memory_space<smem>>
    %56 = vector.broadcast %51 : i32 to vector<16x1xi32>
    %57 = arith.cmpi sge, %1, %56 : vector<16x1xi32>
    %58 = vector.broadcast %55 : i32 to vector<16x1xi32>
    %59 = arith.cmpi slt, %1, %58 : vector<16x1xi32>
    %60 = arith.andi %57, %59 : vector<16x1xi1>
    %cst_20 = arith.constant -3.40282347E+38 : f32
    %61 = vector.shape_cast %60 : vector<16x1xi1> to vector<16x1xi1>
    %62 = vector.broadcast %61 : vector<16x1xi1> to vector<16x128xi1>
    %63 = vector.broadcast %cst_20 : f32 to vector<16x128xf32>
    %64 = arith.select %62, %21, %63 : vector<16x128xi1>, vector<16x128xf32>
    %cst_21 = arith.constant dense<0xFF800000> : vector<128xf32>
    %65 = vector.multi_reduction <maximumf>, %64, %cst_21 [0] : vector<16x128xf32> to vector<128xf32>
    %66 = arith.cmpi sle, %9, %5 : i32
    %67 = arith.cmpi sle, %55, %51 : i32
    %68 = arith.ori %66, %67 : i1
    %cst_22 = arith.constant 0.000000e+00 : f32
    %69 = vector.broadcast %cst_22 : f32 to vector<128xf32>
    %70 = arith.select %68, %69, %65 : vector<128xf32>
    %c0_23 = arith.constant 0 : index
    %c0_24 = arith.constant 0 : index
    %c1 = arith.constant 1 : index
    %c0_25 = arith.constant 0 : index
    %71 = vector.load %arg8[%c0_23, %c0_24, %c1, %c0_25] : memref<1x4x4x128xf32, #tpu.memory_space<vmem>>, vector<1x1x1x128xf32>
    %72 = vector.shape_cast %71 : vector<1x1x1x128xf32> to vector<128xf32>
    %73 = vector.shape_cast %70 : vector<128xf32> to vector<1x1x1x128xf32>
    tpu.vector_store %arg8[%c0_23, %c0_24, %c1, %c0_25], %73 {strides = array<i32>} : memref<1x4x4x128xf32, #tpu.memory_space<vmem>>, vector<1x1x1x128xf32>,
    %c4_i32_26 = arith.constant 4 : i32
    %74 = arith.muli %arg1, %c4_i32_26 : i32
    %c2_i32 = arith.constant 2 : i32
    %75 = arith.addi %74, %c2_i32 : i32
    %76 = arith.index_cast %75 : i32 to index
    %77 = memref.load %arg5[%76] : memref<24xi32, #tpu.memory_space<smem>>
    %c4_i32_27 = arith.constant 4 : i32
    %78 = arith.muli %arg1, %c4_i32_27 : i32
    %c2_i32_28 = arith.constant 2 : i32
    %79 = arith.addi %78, %c2_i32_28 : i32
    %80 = arith.index_cast %79 : i32 to index
    %81 = memref.load %arg6[%80] : memref<24xi32, #tpu.memory_space<smem>>
    %82 = vector.broadcast %77 : i32 to vector<16x1xi32>
    %83 = arith.cmpi sge, %1, %82 : vector<16x1xi32>
    %84 = vector.broadcast %81 : i32 to vector<16x1xi32>
    %85 = arith.cmpi slt, %1, %84 : vector<16x1xi32>
    %86 = arith.andi %83, %85 : vector<16x1xi1>
    %cst_29 = arith.constant -3.40282347E+38 : f32
    %87 = vector.shape_cast %86 : vector<16x1xi1> to vector<16x1xi1>
    %88 = vector.broadcast %87 : vector<16x1xi1> to vector<16x128xi1>
    %89 = vector.broadcast %cst_29 : f32 to vector<16x128xf32>
    %90 = arith.select %88, %21, %89 : vector<16x128xi1>, vector<16x128xf32>
    %cst_30 = arith.constant dense<0xFF800000> : vector<128xf32>
    %91 = vector.multi_reduction <maximumf>, %90, %cst_30 [0] : vector<16x128xf32> to vector<128xf32>
    %92 = arith.cmpi sle, %9, %5 : i32
    %93 = arith.cmpi sle, %81, %77 : i32
    %94 = arith.ori %92, %93 : i1
    %cst_31 = arith.constant 0.000000e+00 : f32
    %95 = vector.broadcast %cst_31 : f32 to vector<128xf32>
    %96 = arith.select %94, %95, %91 : vector<128xf32>
    %c0_32 = arith.constant 0 : index
    %c0_33 = arith.constant 0 : index
    %c2 = arith.constant 2 : index
    %c0_34 = arith.constant 0 : index
    %97 = vector.load %arg8[%c0_32, %c0_33, %c2, %c0_34] : memref<1x4x4x128xf32, #tpu.memory_space<vmem>>, vector<1x1x1x128xf32>
    %98 = vector.shape_cast %97 : vector<1x1x1x128xf32> to vector<128xf32>
    %99 = vector.shape_cast %96 : vector<128xf32> to vector<1x1x1x128xf32>
    tpu.vector_store %arg8[%c0_32, %c0_33, %c2, %c0_34], %99 {strides = array<i32>} : memref<1x4x4x128xf32, #tpu.memory_space<vmem>>, vector<1x1x1x128xf32>,
    %c4_i32_35 = arith.constant 4 : i32
    %100 = arith.muli %arg1, %c4_i32_35 : i32
    %c3_i32 = arith.constant 3 : i32
    %101 = arith.addi %100, %c3_i32 : i32
    %102 = arith.index_cast %101 : i32 to index
    %103 = memref.load %arg5[%102] : memref<24xi32, #tpu.memory_space<smem>>
    %c4_i32_36 = arith.constant 4 : i32
    %104 = arith.muli %arg1, %c4_i32_36 : i32
    %c3_i32_37 = arith.constant 3 : i32
    %105 = arith.addi %104, %c3_i32_37 : i32
    %106 = arith.index_cast %105 : i32 to index
    %107 = memref.load %arg6[%106] : memref<24xi32, #tpu.memory_space<smem>>
    %108 = vector.broadcast %103 : i32 to vector<16x1xi32>
    %109 = arith.cmpi sge, %1, %108 : vector<16x1xi32>
    %110 = vector.broadcast %107 : i32 to vector<16x1xi32>
    %111 = arith.cmpi slt, %1, %110 : vector<16x1xi32>
    %112 = arith.andi %109, %111 : vector<16x1xi1>
    %cst_38 = arith.constant -3.40282347E+38 : f32
    %113 = vector.shape_cast %112 : vector<16x1xi1> to vector<16x1xi1>
    %114 = vector.broadcast %113 : vector<16x1xi1> to vector<16x128xi1>
    %115 = vector.broadcast %cst_38 : f32 to vector<16x128xf32>
    %116 = arith.select %114, %21, %115 : vector<16x128xi1>, vector<16x128xf32>
    %cst_39 = arith.constant dense<0xFF800000> : vector<128xf32>
    %117 = vector.multi_reduction <maximumf>, %116, %cst_39 [0] : vector<16x128xf32> to vector<128xf32>
    %118 = arith.cmpi sle, %9, %5 : i32
    %119 = arith.cmpi sle, %107, %103 : i32
    %120 = arith.ori %118, %119 : i1
    %cst_40 = arith.constant 0.000000e+00 : f32
    %121 = vector.broadcast %cst_40 : f32 to vector<128xf32>
    %122 = arith.select %120, %121, %117 : vector<128xf32>
    %c0_41 = arith.constant 0 : index
    %c0_42 = arith.constant 0 : index
    %c3 = arith.constant 3 : index
    %c0_43 = arith.constant 0 : index
    %123 = vector.load %arg8[%c0_41, %c0_42, %c3, %c0_43] : memref<1x4x4x128xf32, #tpu.memory_space<vmem>>, vector<1x1x1x128xf32>
    %124 = vector.shape_cast %123 : vector<1x1x1x128xf32> to vector<128xf32>
    %125 = vector.shape_cast %122 : vector<128xf32> to vector<1x1x1x128xf32>
    tpu.vector_store %arg8[%c0_41, %c0_42, %c3, %c0_43], %125 {strides = array<i32>} : memref<1x4x4x128xf32, #tpu.memory_space<vmem>>, vector<1x1x1x128xf32>,
    %c4_i32_44 = arith.constant 4 : i32
    %126 = arith.muli %arg1, %c4_i32_44 : i32
    %c1_i32_45 = arith.constant 1 : i32
    %127 = arith.addi %126, %c1_i32_45 : i32
    %128 = arith.index_cast %127 : i32 to index
    %129 = memref.load %arg3[%128] : memref<24xi32, #tpu.memory_space<smem>>
    %c4_i32_46 = arith.constant 4 : i32
    %130 = arith.muli %arg1, %c4_i32_46 : i32
    %c1_i32_47 = arith.constant 1 : i32
    %131 = arith.addi %130, %c1_i32_47 : i32
    %132 = arith.index_cast %131 : i32 to index
    %133 = memref.load %arg4[%132] : memref<24xi32, #tpu.memory_space<smem>>
    %134 = vector.broadcast %129 : i32 to vector<16x1x1xi32>
    %135 = arith.cmpi sge, %0, %134 : vector<16x1x1xi32>
    %136 = vector.broadcast %133 : i32 to vector<16x1x1xi32>
    %137 = arith.cmpi slt, %0, %136 : vector<16x1x1xi32>
    %138 = arith.andi %135, %137 : vector<16x1x1xi1>
    %c0_48 = arith.constant 0 : index
    %c0_49 = arith.constant 0 : index
    %c0_50 = arith.constant 0 : index
    %c0_51 = arith.constant 0 : index
    %139 = vector.load %arg7[%c0_48, %c0_49, %c0_50, %c0_51] : memref<1x16x16x128xf32, #tpu.memory_space<vmem>>, vector<1x16x16x128xf32>
    %140 = vector.shape_cast %139 : vector<1x16x16x128xf32> to vector<16x16x128xf32>
    %cst_52 = arith.constant -3.40282347E+38 : f32
    %141 = vector.shape_cast %138 : vector<16x1x1xi1> to vector<16x1x1xi1>
    %142 = vector.broadcast %141 : vector<16x1x1xi1> to vector<16x16x128xi1>
    %143 = vector.broadcast %cst_52 : f32 to vector<16x16x128xf32>
    %144 = arith.select %142, %140, %143 : vector<16x16x128xi1>, vector<16x16x128xf32>
    %cst_53 = arith.constant dense<0xFF800000> : vector<16x128xf32>
    %145 = vector.multi_reduction <maximumf>, %144, %cst_53 [0] : vector<16x16x128xf32> to vector<16x128xf32>
    %c4_i32_54 = arith.constant 4 : i32
    %146 = arith.muli %arg1, %c4_i32_54 : i32
    %c0_i32_55 = arith.constant 0 : i32
    %147 = arith.addi %146, %c0_i32_55 : i32
    %148 = arith.index_cast %147 : i32 to index
    %149 = memref.load %arg5[%148] : memref<24xi32, #tpu.memory_space<smem>>
    %c4_i32_56 = arith.constant 4 : i32
    %150 = arith.muli %arg1, %c4_i32_56 : i32
    %c0_i32_57 = arith.constant 0 : i32
    %151 = arith.addi %150, %c0_i32_57 : i32
    %152 = arith.index_cast %151 : i32 to index
    %153 = memref.load %arg6[%152] : memref<24xi32, #tpu.memory_space<smem>>
    %154 = vector.broadcast %149 : i32 to vector<16x1xi32>
    %155 = arith.cmpi sge, %1, %154 : vector<16x1xi32>
    %156 = vector.broadcast %153 : i32 to vector<16x1xi32>
    %157 = arith.cmpi slt, %1, %156 : vector<16x1xi32>
    %158 = arith.andi %155, %157 : vector<16x1xi1>
    %cst_58 = arith.constant -3.40282347E+38 : f32
    %159 = vector.shape_cast %158 : vector<16x1xi1> to vector<16x1xi1>
    %160 = vector.broadcast %159 : vector<16x1xi1> to vector<16x128xi1>
    %161 = vector.broadcast %cst_58 : f32 to vector<16x128xf32>
    %162 = arith.select %160, %145, %161 : vector<16x128xi1>, vector<16x128xf32>
    %cst_59 = arith.constant dense<0xFF800000> : vector<128xf32>
    %163 = vector.multi_reduction <maximumf>, %162, %cst_59 [0] : vector<16x128xf32> to vector<128xf32>
    %164 = arith.cmpi sle, %133, %129 : i32
    %165 = arith.cmpi sle, %153, %149 : i32
    %166 = arith.ori %164, %165 : i1
    %cst_60 = arith.constant 0.000000e+00 : f32
    %167 = vector.broadcast %cst_60 : f32 to vector<128xf32>
    %168 = arith.select %166, %167, %163 : vector<128xf32>
    %c0_61 = arith.constant 0 : index
    %c1_62 = arith.constant 1 : index
    %c0_63 = arith.constant 0 : index
    %c0_64 = arith.constant 0 : index
    %169 = vector.load %arg8[%c0_61, %c1_62, %c0_63, %c0_64] : memref<1x4x4x128xf32, #tpu.memory_space<vmem>>, vector<1x1x1x128xf32>
    %170 = vector.shape_cast %169 : vector<1x1x1x128xf32> to vector<128xf32>
    %171 = vector.shape_cast %168 : vector<128xf32> to vector<1x1x1x128xf32>
    tpu.vector_store %arg8[%c0_61, %c1_62, %c0_63, %c0_64], %171 {strides = array<i32>} : memref<1x4x4x128xf32, #tpu.memory_space<vmem>>, vector<1x1x1x128xf32>,
    %c4_i32_65 = arith.constant 4 : i32
    %172 = arith.muli %arg1, %c4_i32_65 : i32
    %c1_i32_66 = arith.constant 1 : i32
    %173 = arith.addi %172, %c1_i32_66 : i32
    %174 = arith.index_cast %173 : i32 to index
    %175 = memref.load %arg5[%174] : memref<24xi32, #tpu.memory_space<smem>>
    %c4_i32_67 = arith.constant 4 : i32
    %176 = arith.muli %arg1, %c4_i32_67 : i32
    %c1_i32_68 = arith.constant 1 : i32
    %177 = arith.addi %176, %c1_i32_68 : i32
    %178 = arith.index_cast %177 : i32 to index
    %179 = memref.load %arg6[%178] : memref<24xi32, #tpu.memory_space<smem>>
    %180 = vector.broadcast %175 : i32 to vector<16x1xi32>
    %181 = arith.cmpi sge, %1, %180 : vector<16x1xi32>
    %182 = vector.broadcast %179 : i32 to vector<16x1xi32>
    %183 = arith.cmpi slt, %1, %182 : vector<16x1xi32>
    %184 = arith.andi %181, %183 : vector<16x1xi1>
    %cst_69 = arith.constant -3.40282347E+38 : f32
    %185 = vector.shape_cast %184 : vector<16x1xi1> to vector<16x1xi1>
    %186 = vector.broadcast %185 : vector<16x1xi1> to vector<16x128xi1>
    %187 = vector.broadcast %cst_69 : f32 to vector<16x128xf32>
    %188 = arith.select %186, %145, %187 : vector<16x128xi1>, vector<16x128xf32>
    %cst_70 = arith.constant dense<0xFF800000> : vector<128xf32>
    %189 = vector.multi_reduction <maximumf>, %188, %cst_70 [0] : vector<16x128xf32> to vector<128xf32>
    %190 = arith.cmpi sle, %133, %129 : i32
    %191 = arith.cmpi sle, %179, %175 : i32
    %192 = arith.ori %190, %191 : i1
    %cst_71 = arith.constant 0.000000e+00 : f32
    %193 = vector.broadcast %cst_71 : f32 to vector<128xf32>
    %194 = arith.select %192, %193, %189 : vector<128xf32>
    %c0_72 = arith.constant 0 : index
    %c1_73 = arith.constant 1 : index
    %c1_74 = arith.constant 1 : index
    %c0_75 = arith.constant 0 : index
    %195 = vector.load %arg8[%c0_72, %c1_73, %c1_74, %c0_75] : memref<1x4x4x128xf32, #tpu.memory_space<vmem>>, vector<1x1x1x128xf32>
    %196 = vector.shape_cast %195 : vector<1x1x1x128xf32> to vector<128xf32>
    %197 = vector.shape_cast %194 : vector<128xf32> to vector<1x1x1x128xf32>
    tpu.vector_store %arg8[%c0_72, %c1_73, %c1_74, %c0_75], %197 {strides = array<i32>} : memref<1x4x4x128xf32, #tpu.memory_space<vmem>>, vector<1x1x1x128xf32>,
    %c4_i32_76 = arith.constant 4 : i32
    %198 = arith.muli %arg1, %c4_i32_76 : i32
    %c2_i32_77 = arith.constant 2 : i32
    %199 = arith.addi %198, %c2_i32_77 : i32
    %200 = arith.index_cast %199 : i32 to index
    %201 = memref.load %arg5[%200] : memref<24xi32, #tpu.memory_space<smem>>
    %c4_i32_78 = arith.constant 4 : i32
    %202 = arith.muli %arg1, %c4_i32_78 : i32
    %c2_i32_79 = arith.constant 2 : i32
    %203 = arith.addi %202, %c2_i32_79 : i32
    %204 = arith.index_cast %203 : i32 to index
    %205 = memref.load %arg6[%204] : memref<24xi32, #tpu.memory_space<smem>>
    %206 = vector.broadcast %201 : i32 to vector<16x1xi32>
    %207 = arith.cmpi sge, %1, %206 : vector<16x1xi32>
    %208 = vector.broadcast %205 : i32 to vector<16x1xi32>
    %209 = arith.cmpi slt, %1, %208 : vector<16x1xi32>
    %210 = arith.andi %207, %209 : vector<16x1xi1>
    %cst_80 = arith.constant -3.40282347E+38 : f32
    %211 = vector.shape_cast %210 : vector<16x1xi1> to vector<16x1xi1>
    %212 = vector.broadcast %211 : vector<16x1xi1> to vector<16x128xi1>
    %213 = vector.broadcast %cst_80 : f32 to vector<16x128xf32>
    %214 = arith.select %212, %145, %213 : vector<16x128xi1>, vector<16x128xf32>
    %cst_81 = arith.constant dense<0xFF800000> : vector<128xf32>
    %215 = vector.multi_reduction <maximumf>, %214, %cst_81 [0] : vector<16x128xf32> to vector<128xf32>
    %216 = arith.cmpi sle, %133, %129 : i32
    %217 = arith.cmpi sle, %205, %201 : i32
    %218 = arith.ori %216, %217 : i1
    %cst_82 = arith.constant 0.000000e+00 : f32
    %219 = vector.broadcast %cst_82 : f32 to vector<128xf32>
    %220 = arith.select %218, %219, %215 : vector<128xf32>
    %c0_83 = arith.constant 0 : index
    %c1_84 = arith.constant 1 : index
    %c2_85 = arith.constant 2 : index
    %c0_86 = arith.constant 0 : index
    %221 = vector.load %arg8[%c0_83, %c1_84, %c2_85, %c0_86] : memref<1x4x4x128xf32, #tpu.memory_space<vmem>>, vector<1x1x1x128xf32>
    %222 = vector.shape_cast %221 : vector<1x1x1x128xf32> to vector<128xf32>
    %223 = vector.shape_cast %220 : vector<128xf32> to vector<1x1x1x128xf32>
    tpu.vector_store %arg8[%c0_83, %c1_84, %c2_85, %c0_86], %223 {strides = array<i32>} : memref<1x4x4x128xf32, #tpu.memory_space<vmem>>, vector<1x1x1x128xf32>,
    %c4_i32_87 = arith.constant 4 : i32
    %224 = arith.muli %arg1, %c4_i32_87 : i32
    %c3_i32_88 = arith.constant 3 : i32
    %225 = arith.addi %224, %c3_i32_88 : i32
    %226 = arith.index_cast %225 : i32 to index
    %227 = memref.load %arg5[%226] : memref<24xi32, #tpu.memory_space<smem>>
    %c4_i32_89 = arith.constant 4 : i32
    %228 = arith.muli %arg1, %c4_i32_89 : i32
    %c3_i32_90 = arith.constant 3 : i32
    %229 = arith.addi %228, %c3_i32_90 : i32
    %230 = arith.index_cast %229 : i32 to index
    %231 = memref.load %arg6[%230] : memref<24xi32, #tpu.memory_space<smem>>
    %232 = vector.broadcast %227 : i32 to vector<16x1xi32>
    %233 = arith.cmpi sge, %1, %232 : vector<16x1xi32>
    %234 = vector.broadcast %231 : i32 to vector<16x1xi32>
    %235 = arith.cmpi slt, %1, %234 : vector<16x1xi32>
    %236 = arith.andi %233, %235 : vector<16x1xi1>
    %cst_91 = arith.constant -3.40282347E+38 : f32
    %237 = vector.shape_cast %236 : vector<16x1xi1> to vector<16x1xi1>
    %238 = vector.broadcast %237 : vector<16x1xi1> to vector<16x128xi1>
    %239 = vector.broadcast %cst_91 : f32 to vector<16x128xf32>
    %240 = arith.select %238, %145, %239 : vector<16x128xi1>, vector<16x128xf32>
    %cst_92 = arith.constant dense<0xFF800000> : vector<128xf32>
    %241 = vector.multi_reduction <maximumf>, %240, %cst_92 [0] : vector<16x128xf32> to vector<128xf32>
    %242 = arith.cmpi sle, %133, %129 : i32
    %243 = arith.cmpi sle, %231, %227 : i32
    %244 = arith.ori %242, %243 : i1
    %cst_93 = arith.constant 0.000000e+00 : f32
    %245 = vector.broadcast %cst_93 : f32 to vector<128xf32>
    %246 = arith.select %244, %245, %241 : vector<128xf32>
    %c0_94 = arith.constant 0 : index
    %c1_95 = arith.constant 1 : index
    %c3_96 = arith.constant 3 : index
    %c0_97 = arith.constant 0 : index
    %247 = vector.load %arg8[%c0_94, %c1_95, %c3_96, %c0_97] : memref<1x4x4x128xf32, #tpu.memory_space<vmem>>, vector<1x1x1x128xf32>
    %248 = vector.shape_cast %247 : vector<1x1x1x128xf32> to vector<128xf32>
    %249 = vector.shape_cast %246 : vector<128xf32> to vector<1x1x1x128xf32>
    tpu.vector_store %arg8[%c0_94, %c1_95, %c3_96, %c0_97], %249 {strides = array<i32>} : memref<1x4x4x128xf32, #tpu.memory_space<vmem>>, vector<1x1x1x128xf32>,
    %c4_i32_98 = arith.constant 4 : i32
    %250 = arith.muli %arg1, %c4_i32_98 : i32
    %c2_i32_99 = arith.constant 2 : i32
    %251 = arith.addi %250, %c2_i32_99 : i32
    %252 = arith.index_cast %251 : i32 to index
    %253 = memref.load %arg3[%252] : memref<24xi32, #tpu.memory_space<smem>>
    %c4_i32_100 = arith.constant 4 : i32
    %254 = arith.muli %arg1, %c4_i32_100 : i32
    %c2_i32_101 = arith.constant 2 : i32
    %255 = arith.addi %254, %c2_i32_101 : i32
    %256 = arith.index_cast %255 : i32 to index
    %257 = memref.load %arg4[%256] : memref<24xi32, #tpu.memory_space<smem>>
    %258 = vector.broadcast %253 : i32 to vector<16x1x1xi32>
    %259 = arith.cmpi sge, %0, %258 : vector<16x1x1xi32>
    %260 = vector.broadcast %257 : i32 to vector<16x1x1xi32>
    %261 = arith.cmpi slt, %0, %260 : vector<16x1x1xi32>
    %262 = arith.andi %259, %261 : vector<16x1x1xi1>
    %c0_102 = arith.constant 0 : index
    %c0_103 = arith.constant 0 : index
    %c0_104 = arith.constant 0 : index
    %c0_105 = arith.constant 0 : index
    %263 = vector.load %arg7[%c0_102, %c0_103, %c0_104, %c0_105] : memref<1x16x16x128xf32, #tpu.memory_space<vmem>>, vector<1x16x16x128xf32>
    %264 = vector.shape_cast %263 : vector<1x16x16x128xf32> to vector<16x16x128xf32>
    %cst_106 = arith.constant -3.40282347E+38 : f32
    %265 = vector.shape_cast %262 : vector<16x1x1xi1> to vector<16x1x1xi1>
    %266 = vector.broadcast %265 : vector<16x1x1xi1> to vector<16x16x128xi1>
    %267 = vector.broadcast %cst_106 : f32 to vector<16x16x128xf32>
    %268 = arith.select %266, %264, %267 : vector<16x16x128xi1>, vector<16x16x128xf32>
    %cst_107 = arith.constant dense<0xFF800000> : vector<16x128xf32>
    %269 = vector.multi_reduction <maximumf>, %268, %cst_107 [0] : vector<16x16x128xf32> to vector<16x128xf32>
    %c4_i32_108 = arith.constant 4 : i32
    %270 = arith.muli %arg1, %c4_i32_108 : i32
    %c0_i32_109 = arith.constant 0 : i32
    %271 = arith.addi %270, %c0_i32_109 : i32
    %272 = arith.index_cast %271 : i32 to index
    %273 = memref.load %arg5[%272] : memref<24xi32, #tpu.memory_space<smem>>
    %c4_i32_110 = arith.constant 4 : i32
    %274 = arith.muli %arg1, %c4_i32_110 : i32
    %c0_i32_111 = arith.constant 0 : i32
    %275 = arith.addi %274, %c0_i32_111 : i32
    %276 = arith.index_cast %275 : i32 to index
    %277 = memref.load %arg6[%276] : memref<24xi32, #tpu.memory_space<smem>>
    %278 = vector.broadcast %273 : i32 to vector<16x1xi32>
    %279 = arith.cmpi sge, %1, %278 : vector<16x1xi32>
    %280 = vector.broadcast %277 : i32 to vector<16x1xi32>
    %281 = arith.cmpi slt, %1, %280 : vector<16x1xi32>
    %282 = arith.andi %279, %281 : vector<16x1xi1>
    %cst_112 = arith.constant -3.40282347E+38 : f32
    %283 = vector.shape_cast %282 : vector<16x1xi1> to vector<16x1xi1>
    %284 = vector.broadcast %283 : vector<16x1xi1> to vector<16x128xi1>
    %285 = vector.broadcast %cst_112 : f32 to vector<16x128xf32>
    %286 = arith.select %284, %269, %285 : vector<16x128xi1>, vector<16x128xf32>
    %cst_113 = arith.constant dense<0xFF800000> : vector<128xf32>
    %287 = vector.multi_reduction <maximumf>, %286, %cst_113 [0] : vector<16x128xf32> to vector<128xf32>
    %288 = arith.cmpi sle, %257, %253 : i32
    %289 = arith.cmpi sle, %277, %273 : i32
    %290 = arith.ori %288, %289 : i1
    %cst_114 = arith.constant 0.000000e+00 : f32
    %291 = vector.broadcast %cst_114 : f32 to vector<128xf32>
    %292 = arith.select %290, %291, %287 : vector<128xf32>
    %c0_115 = arith.constant 0 : index
    %c2_116 = arith.constant 2 : index
    %c0_117 = arith.constant 0 : index
    %c0_118 = arith.constant 0 : index
    %293 = vector.load %arg8[%c0_115, %c2_116, %c0_117, %c0_118] : memref<1x4x4x128xf32, #tpu.memory_space<vmem>>, vector<1x1x1x128xf32>
    %294 = vector.shape_cast %293 : vector<1x1x1x128xf32> to vector<128xf32>
    %295 = vector.shape_cast %292 : vector<128xf32> to vector<1x1x1x128xf32>
    tpu.vector_store %arg8[%c0_115, %c2_116, %c0_117, %c0_118], %295 {strides = array<i32>} : memref<1x4x4x128xf32, #tpu.memory_space<vmem>>, vector<1x1x1x128xf32>,
    %c4_i32_119 = arith.constant 4 : i32
    %296 = arith.muli %arg1, %c4_i32_119 : i32
    %c1_i32_120 = arith.constant 1 : i32
    %297 = arith.addi %296, %c1_i32_120 : i32
    %298 = arith.index_cast %297 : i32 to index
    %299 = memref.load %arg5[%298] : memref<24xi32, #tpu.memory_space<smem>>
    %c4_i32_121 = arith.constant 4 : i32
    %300 = arith.muli %arg1, %c4_i32_121 : i32
    %c1_i32_122 = arith.constant 1 : i32
    %301 = arith.addi %300, %c1_i32_122 : i32
    %302 = arith.index_cast %301 : i32 to index
    %303 = memref.load %arg6[%302] : memref<24xi32, #tpu.memory_space<smem>>
    %304 = vector.broadcast %299 : i32 to vector<16x1xi32>
    %305 = arith.cmpi sge, %1, %304 : vector<16x1xi32>
    %306 = vector.broadcast %303 : i32 to vector<16x1xi32>
    %307 = arith.cmpi slt, %1, %306 : vector<16x1xi32>
    %308 = arith.andi %305, %307 : vector<16x1xi1>
    %cst_123 = arith.constant -3.40282347E+38 : f32
    %309 = vector.shape_cast %308 : vector<16x1xi1> to vector<16x1xi1>
    %310 = vector.broadcast %309 : vector<16x1xi1> to vector<16x128xi1>
    %311 = vector.broadcast %cst_123 : f32 to vector<16x128xf32>
    %312 = arith.select %310, %269, %311 : vector<16x128xi1>, vector<16x128xf32>
    %cst_124 = arith.constant dense<0xFF800000> : vector<128xf32>
    %313 = vector.multi_reduction <maximumf>, %312, %cst_124 [0] : vector<16x128xf32> to vector<128xf32>
    %314 = arith.cmpi sle, %257, %253 : i32
    %315 = arith.cmpi sle, %303, %299 : i32
    %316 = arith.ori %314, %315 : i1
    %cst_125 = arith.constant 0.000000e+00 : f32
    %317 = vector.broadcast %cst_125 : f32 to vector<128xf32>
    %318 = arith.select %316, %317, %313 : vector<128xf32>
    %c0_126 = arith.constant 0 : index
    %c2_127 = arith.constant 2 : index
    %c1_128 = arith.constant 1 : index
    %c0_129 = arith.constant 0 : index
    %319 = vector.load %arg8[%c0_126, %c2_127, %c1_128, %c0_129] : memref<1x4x4x128xf32, #tpu.memory_space<vmem>>, vector<1x1x1x128xf32>
    %320 = vector.shape_cast %319 : vector<1x1x1x128xf32> to vector<128xf32>
    %321 = vector.shape_cast %318 : vector<128xf32> to vector<1x1x1x128xf32>
    tpu.vector_store %arg8[%c0_126, %c2_127, %c1_128, %c0_129], %321 {strides = array<i32>} : memref<1x4x4x128xf32, #tpu.memory_space<vmem>>, vector<1x1x1x128xf32>,
    %c4_i32_130 = arith.constant 4 : i32
    %322 = arith.muli %arg1, %c4_i32_130 : i32
    %c2_i32_131 = arith.constant 2 : i32
    %323 = arith.addi %322, %c2_i32_131 : i32
    %324 = arith.index_cast %323 : i32 to index
    %325 = memref.load %arg5[%324] : memref<24xi32, #tpu.memory_space<smem>>
    %c4_i32_132 = arith.constant 4 : i32
    %326 = arith.muli %arg1, %c4_i32_132 : i32
    %c2_i32_133 = arith.constant 2 : i32
    %327 = arith.addi %326, %c2_i32_133 : i32
    %328 = arith.index_cast %327 : i32 to index
    %329 = memref.load %arg6[%328] : memref<24xi32, #tpu.memory_space<smem>>
    %330 = vector.broadcast %325 : i32 to vector<16x1xi32>
    %331 = arith.cmpi sge, %1, %330 : vector<16x1xi32>
    %332 = vector.broadcast %329 : i32 to vector<16x1xi32>
    %333 = arith.cmpi slt, %1, %332 : vector<16x1xi32>
    %334 = arith.andi %331, %333 : vector<16x1xi1>
    %cst_134 = arith.constant -3.40282347E+38 : f32
    %335 = vector.shape_cast %334 : vector<16x1xi1> to vector<16x1xi1>
    %336 = vector.broadcast %335 : vector<16x1xi1> to vector<16x128xi1>
    %337 = vector.broadcast %cst_134 : f32 to vector<16x128xf32>
    %338 = arith.select %336, %269, %337 : vector<16x128xi1>, vector<16x128xf32>
    %cst_135 = arith.constant dense<0xFF800000> : vector<128xf32>
    %339 = vector.multi_reduction <maximumf>, %338, %cst_135 [0] : vector<16x128xf32> to vector<128xf32>
    %340 = arith.cmpi sle, %257, %253 : i32
    %341 = arith.cmpi sle, %329, %325 : i32
    %342 = arith.ori %340, %341 : i1
    %cst_136 = arith.constant 0.000000e+00 : f32
    %343 = vector.broadcast %cst_136 : f32 to vector<128xf32>
    %344 = arith.select %342, %343, %339 : vector<128xf32>
    %c0_137 = arith.constant 0 : index
    %c2_138 = arith.constant 2 : index
    %c2_139 = arith.constant 2 : index
    %c0_140 = arith.constant 0 : index
    %345 = vector.load %arg8[%c0_137, %c2_138, %c2_139, %c0_140] : memref<1x4x4x128xf32, #tpu.memory_space<vmem>>, vector<1x1x1x128xf32>
    %346 = vector.shape_cast %345 : vector<1x1x1x128xf32> to vector<128xf32>
    %347 = vector.shape_cast %344 : vector<128xf32> to vector<1x1x1x128xf32>
    tpu.vector_store %arg8[%c0_137, %c2_138, %c2_139, %c0_140], %347 {strides = array<i32>} : memref<1x4x4x128xf32, #tpu.memory_space<vmem>>, vector<1x1x1x128xf32>,
    %c4_i32_141 = arith.constant 4 : i32
    %348 = arith.muli %arg1, %c4_i32_141 : i32
    %c3_i32_142 = arith.constant 3 : i32
    %349 = arith.addi %348, %c3_i32_142 : i32
    %350 = arith.index_cast %349 : i32 to index
    %351 = memref.load %arg5[%350] : memref<24xi32, #tpu.memory_space<smem>>
    %c4_i32_143 = arith.constant 4 : i32
    %352 = arith.muli %arg1, %c4_i32_143 : i32
    %c3_i32_144 = arith.constant 3 : i32
    %353 = arith.addi %352, %c3_i32_144 : i32
    %354 = arith.index_cast %353 : i32 to index
    %355 = memref.load %arg6[%354] : memref<24xi32, #tpu.memory_space<smem>>
    %356 = vector.broadcast %351 : i32 to vector<16x1xi32>
    %357 = arith.cmpi sge, %1, %356 : vector<16x1xi32>
    %358 = vector.broadcast %355 : i32 to vector<16x1xi32>
    %359 = arith.cmpi slt, %1, %358 : vector<16x1xi32>
    %360 = arith.andi %357, %359 : vector<16x1xi1>
    %cst_145 = arith.constant -3.40282347E+38 : f32
    %361 = vector.shape_cast %360 : vector<16x1xi1> to vector<16x1xi1>
    %362 = vector.broadcast %361 : vector<16x1xi1> to vector<16x128xi1>
    %363 = vector.broadcast %cst_145 : f32 to vector<16x128xf32>
    %364 = arith.select %362, %269, %363 : vector<16x128xi1>, vector<16x128xf32>
    %cst_146 = arith.constant dense<0xFF800000> : vector<128xf32>
    %365 = vector.multi_reduction <maximumf>, %364, %cst_146 [0] : vector<16x128xf32> to vector<128xf32>
    %366 = arith.cmpi sle, %257, %253 : i32
    %367 = arith.cmpi sle, %355, %351 : i32
    %368 = arith.ori %366, %367 : i1
    %cst_147 = arith.constant 0.000000e+00 : f32
    %369 = vector.broadcast %cst_147 : f32 to vector<128xf32>
    %370 = arith.select %368, %369, %365 : vector<128xf32>
    %c0_148 = arith.constant 0 : index
    %c2_149 = arith.constant 2 : index
    %c3_150 = arith.constant 3 : index
    %c0_151 = arith.constant 0 : index
    %371 = vector.load %arg8[%c0_148, %c2_149, %c3_150, %c0_151] : memref<1x4x4x128xf32, #tpu.memory_space<vmem>>, vector<1x1x1x128xf32>
    %372 = vector.shape_cast %371 : vector<1x1x1x128xf32> to vector<128xf32>
    %373 = vector.shape_cast %370 : vector<128xf32> to vector<1x1x1x128xf32>
    tpu.vector_store %arg8[%c0_148, %c2_149, %c3_150, %c0_151], %373 {strides = array<i32>} : memref<1x4x4x128xf32, #tpu.memory_space<vmem>>, vector<1x1x1x128xf32>,
    %c4_i32_152 = arith.constant 4 : i32
    %374 = arith.muli %arg1, %c4_i32_152 : i32
    %c3_i32_153 = arith.constant 3 : i32
    %375 = arith.addi %374, %c3_i32_153 : i32
    %376 = arith.index_cast %375 : i32 to index
    %377 = memref.load %arg3[%376] : memref<24xi32, #tpu.memory_space<smem>>
    %c4_i32_154 = arith.constant 4 : i32
    %378 = arith.muli %arg1, %c4_i32_154 : i32
    %c3_i32_155 = arith.constant 3 : i32
    %379 = arith.addi %378, %c3_i32_155 : i32
    %380 = arith.index_cast %379 : i32 to index
    %381 = memref.load %arg4[%380] : memref<24xi32, #tpu.memory_space<smem>>
    %382 = vector.broadcast %377 : i32 to vector<16x1x1xi32>
    %383 = arith.cmpi sge, %0, %382 : vector<16x1x1xi32>
    %384 = vector.broadcast %381 : i32 to vector<16x1x1xi32>
    %385 = arith.cmpi slt, %0, %384 : vector<16x1x1xi32>
    %386 = arith.andi %383, %385 : vector<16x1x1xi1>
    %c0_156 = arith.constant 0 : index
    %c0_157 = arith.constant 0 : index
    %c0_158 = arith.constant 0 : index
    %c0_159 = arith.constant 0 : index
    %387 = vector.load %arg7[%c0_156, %c0_157, %c0_158, %c0_159] : memref<1x16x16x128xf32, #tpu.memory_space<vmem>>, vector<1x16x16x128xf32>
    %388 = vector.shape_cast %387 : vector<1x16x16x128xf32> to vector<16x16x128xf32>
    %cst_160 = arith.constant -3.40282347E+38 : f32
    %389 = vector.shape_cast %386 : vector<16x1x1xi1> to vector<16x1x1xi1>
    %390 = vector.broadcast %389 : vector<16x1x1xi1> to vector<16x16x128xi1>
    %391 = vector.broadcast %cst_160 : f32 to vector<16x16x128xf32>
    %392 = arith.select %390, %388, %391 : vector<16x16x128xi1>, vector<16x16x128xf32>
    %cst_161 = arith.constant dense<0xFF800000> : vector<16x128xf32>
    %393 = vector.multi_reduction <maximumf>, %392, %cst_161 [0] : vector<16x16x128xf32> to vector<16x128xf32>
    %c4_i32_162 = arith.constant 4 : i32
    %394 = arith.muli %arg1, %c4_i32_162 : i32
    %c0_i32_163 = arith.constant 0 : i32
    %395 = arith.addi %394, %c0_i32_163 : i32
    %396 = arith.index_cast %395 : i32 to index
    %397 = memref.load %arg5[%396] : memref<24xi32, #tpu.memory_space<smem>>
    %c4_i32_164 = arith.constant 4 : i32
    %398 = arith.muli %arg1, %c4_i32_164 : i32
    %c0_i32_165 = arith.constant 0 : i32
    %399 = arith.addi %398, %c0_i32_165 : i32
    %400 = arith.index_cast %399 : i32 to index
    %401 = memref.load %arg6[%400] : memref<24xi32, #tpu.memory_space<smem>>
    %402 = vector.broadcast %397 : i32 to vector<16x1xi32>
    %403 = arith.cmpi sge, %1, %402 : vector<16x1xi32>
    %404 = vector.broadcast %401 : i32 to vector<16x1xi32>
    %405 = arith.cmpi slt, %1, %404 : vector<16x1xi32>
    %406 = arith.andi %403, %405 : vector<16x1xi1>
    %cst_166 = arith.constant -3.40282347E+38 : f32
    %407 = vector.shape_cast %406 : vector<16x1xi1> to vector<16x1xi1>
    %408 = vector.broadcast %407 : vector<16x1xi1> to vector<16x128xi1>
    %409 = vector.broadcast %cst_166 : f32 to vector<16x128xf32>
    %410 = arith.select %408, %393, %409 : vector<16x128xi1>, vector<16x128xf32>
    %cst_167 = arith.constant dense<0xFF800000> : vector<128xf32>
    %411 = vector.multi_reduction <maximumf>, %410, %cst_167 [0] : vector<16x128xf32> to vector<128xf32>
    %412 = arith.cmpi sle, %381, %377 : i32
    %413 = arith.cmpi sle, %401, %397 : i32
    %414 = arith.ori %412, %413 : i1
    %cst_168 = arith.constant 0.000000e+00 : f32
    %415 = vector.broadcast %cst_168 : f32 to vector<128xf32>
    %416 = arith.select %414, %415, %411 : vector<128xf32>
    %c0_169 = arith.constant 0 : index
    %c3_170 = arith.constant 3 : index
    %c0_171 = arith.constant 0 : index
    %c0_172 = arith.constant 0 : index
    %417 = vector.load %arg8[%c0_169, %c3_170, %c0_171, %c0_172] : memref<1x4x4x128xf32, #tpu.memory_space<vmem>>, vector<1x1x1x128xf32>
    %418 = vector.shape_cast %417 : vector<1x1x1x128xf32> to vector<128xf32>
    %419 = vector.shape_cast %416 : vector<128xf32> to vector<1x1x1x128xf32>
    tpu.vector_store %arg8[%c0_169, %c3_170, %c0_171, %c0_172], %419 {strides = array<i32>} : memref<1x4x4x128xf32, #tpu.memory_space<vmem>>, vector<1x1x1x128xf32>,
    %c4_i32_173 = arith.constant 4 : i32
    %420 = arith.muli %arg1, %c4_i32_173 : i32
    %c1_i32_174 = arith.constant 1 : i32
    %421 = arith.addi %420, %c1_i32_174 : i32
    %422 = arith.index_cast %421 : i32 to index
    %423 = memref.load %arg5[%422] : memref<24xi32, #tpu.memory_space<smem>>
    %c4_i32_175 = arith.constant 4 : i32
    %424 = arith.muli %arg1, %c4_i32_175 : i32
    %c1_i32_176 = arith.constant 1 : i32
    %425 = arith.addi %424, %c1_i32_176 : i32
    %426 = arith.index_cast %425 : i32 to index
    %427 = memref.load %arg6[%426] : memref<24xi32, #tpu.memory_space<smem>>
    %428 = vector.broadcast %423 : i32 to vector<16x1xi32>
    %429 = arith.cmpi sge, %1, %428 : vector<16x1xi32>
    %430 = vector.broadcast %427 : i32 to vector<16x1xi32>
    %431 = arith.cmpi slt, %1, %430 : vector<16x1xi32>
    %432 = arith.andi %429, %431 : vector<16x1xi1>
    %cst_177 = arith.constant -3.40282347E+38 : f32
    %433 = vector.shape_cast %432 : vector<16x1xi1> to vector<16x1xi1>
    %434 = vector.broadcast %433 : vector<16x1xi1> to vector<16x128xi1>
    %435 = vector.broadcast %cst_177 : f32 to vector<16x128xf32>
    %436 = arith.select %434, %393, %435 : vector<16x128xi1>, vector<16x128xf32>
    %cst_178 = arith.constant dense<0xFF800000> : vector<128xf32>
    %437 = vector.multi_reduction <maximumf>, %436, %cst_178 [0] : vector<16x128xf32> to vector<128xf32>
    %438 = arith.cmpi sle, %381, %377 : i32
    %439 = arith.cmpi sle, %427, %423 : i32
    %440 = arith.ori %438, %439 : i1
    %cst_179 = arith.constant 0.000000e+00 : f32
    %441 = vector.broadcast %cst_179 : f32 to vector<128xf32>
    %442 = arith.select %440, %441, %437 : vector<128xf32>
    %c0_180 = arith.constant 0 : index
    %c3_181 = arith.constant 3 : index
    %c1_182 = arith.constant 1 : index
    %c0_183 = arith.constant 0 : index
    %443 = vector.load %arg8[%c0_180, %c3_181, %c1_182, %c0_183] : memref<1x4x4x128xf32, #tpu.memory_space<vmem>>, vector<1x1x1x128xf32>
    %444 = vector.shape_cast %443 : vector<1x1x1x128xf32> to vector<128xf32>
    %445 = vector.shape_cast %442 : vector<128xf32> to vector<1x1x1x128xf32>
    tpu.vector_store %arg8[%c0_180, %c3_181, %c1_182, %c0_183], %445 {strides = array<i32>} : memref<1x4x4x128xf32, #tpu.memory_space<vmem>>, vector<1x1x1x128xf32>,
    %c4_i32_184 = arith.constant 4 : i32
    %446 = arith.muli %arg1, %c4_i32_184 : i32
    %c2_i32_185 = arith.constant 2 : i32
    %447 = arith.addi %446, %c2_i32_185 : i32
    %448 = arith.index_cast %447 : i32 to index
    %449 = memref.load %arg5[%448] : memref<24xi32, #tpu.memory_space<smem>>
    %c4_i32_186 = arith.constant 4 : i32
    %450 = arith.muli %arg1, %c4_i32_186 : i32
    %c2_i32_187 = arith.constant 2 : i32
    %451 = arith.addi %450, %c2_i32_187 : i32
    %452 = arith.index_cast %451 : i32 to index
    %453 = memref.load %arg6[%452] : memref<24xi32, #tpu.memory_space<smem>>
    %454 = vector.broadcast %449 : i32 to vector<16x1xi32>
    %455 = arith.cmpi sge, %1, %454 : vector<16x1xi32>
    %456 = vector.broadcast %453 : i32 to vector<16x1xi32>
    %457 = arith.cmpi slt, %1, %456 : vector<16x1xi32>
    %458 = arith.andi %455, %457 : vector<16x1xi1>
    %cst_188 = arith.constant -3.40282347E+38 : f32
    %459 = vector.shape_cast %458 : vector<16x1xi1> to vector<16x1xi1>
    %460 = vector.broadcast %459 : vector<16x1xi1> to vector<16x128xi1>
    %461 = vector.broadcast %cst_188 : f32 to vector<16x128xf32>
    %462 = arith.select %460, %393, %461 : vector<16x128xi1>, vector<16x128xf32>
    %cst_189 = arith.constant dense<0xFF800000> : vector<128xf32>
    %463 = vector.multi_reduction <maximumf>, %462, %cst_189 [0] : vector<16x128xf32> to vector<128xf32>
    %464 = arith.cmpi sle, %381, %377 : i32
    %465 = arith.cmpi sle, %453, %449 : i32
    %466 = arith.ori %464, %465 : i1
    %cst_190 = arith.constant 0.000000e+00 : f32
    %467 = vector.broadcast %cst_190 : f32 to vector<128xf32>
    %468 = arith.select %466, %467, %463 : vector<128xf32>
    %c0_191 = arith.constant 0 : index
    %c3_192 = arith.constant 3 : index
    %c2_193 = arith.constant 2 : index
    %c0_194 = arith.constant 0 : index
    %469 = vector.load %arg8[%c0_191, %c3_192, %c2_193, %c0_194] : memref<1x4x4x128xf32, #tpu.memory_space<vmem>>, vector<1x1x1x128xf32>
    %470 = vector.shape_cast %469 : vector<1x1x1x128xf32> to vector<128xf32>
    %471 = vector.shape_cast %468 : vector<128xf32> to vector<1x1x1x128xf32>
    tpu.vector_store %arg8[%c0_191, %c3_192, %c2_193, %c0_194], %471 {strides = array<i32>} : memref<1x4x4x128xf32, #tpu.memory_space<vmem>>, vector<1x1x1x128xf32>,
    %c4_i32_195 = arith.constant 4 : i32
    %472 = arith.muli %arg1, %c4_i32_195 : i32
    %c3_i32_196 = arith.constant 3 : i32
    %473 = arith.addi %472, %c3_i32_196 : i32
    %474 = arith.index_cast %473 : i32 to index
    %475 = memref.load %arg5[%474] : memref<24xi32, #tpu.memory_space<smem>>
    %c4_i32_197 = arith.constant 4 : i32
    %476 = arith.muli %arg1, %c4_i32_197 : i32
    %c3_i32_198 = arith.constant 3 : i32
    %477 = arith.addi %476, %c3_i32_198 : i32
    %478 = arith.index_cast %477 : i32 to index
    %479 = memref.load %arg6[%478] : memref<24xi32, #tpu.memory_space<smem>>
    %480 = vector.broadcast %475 : i32 to vector<16x1xi32>
    %481 = arith.cmpi sge, %1, %480 : vector<16x1xi32>
    %482 = vector.broadcast %479 : i32 to vector<16x1xi32>
    %483 = arith.cmpi slt, %1, %482 : vector<16x1xi32>
    %484 = arith.andi %481, %483 : vector<16x1xi1>
    %cst_199 = arith.constant -3.40282347E+38 : f32
    %485 = vector.shape_cast %484 : vector<16x1xi1> to vector<16x1xi1>
    %486 = vector.broadcast %485 : vector<16x1xi1> to vector<16x128xi1>
    %487 = vector.broadcast %cst_199 : f32 to vector<16x128xf32>
    %488 = arith.select %486, %393, %487 : vector<16x128xi1>, vector<16x128xf32>
    %cst_200 = arith.constant dense<0xFF800000> : vector<128xf32>
    %489 = vector.multi_reduction <maximumf>, %488, %cst_200 [0] : vector<16x128xf32> to vector<128xf32>
    %490 = arith.cmpi sle, %381, %377 : i32
    %491 = arith.cmpi sle, %479, %475 : i32
    %492 = arith.ori %490, %491 : i1
    %cst_201 = arith.constant 0.000000e+00 : f32
    %493 = vector.broadcast %cst_201 : f32 to vector<128xf32>
    %494 = arith.select %492, %493, %489 : vector<128xf32>
    %c0_202 = arith.constant 0 : index
    %c3_203 = arith.constant 3 : index
    %c3_204 = arith.constant 3 : index
    %c0_205 = arith.constant 0 : index
    %495 = vector.load %arg8[%c0_202, %c3_203, %c3_204, %c0_205] : memref<1x4x4x128xf32, #tpu.memory_space<vmem>>, vector<1x1x1x128xf32>
    %496 = vector.shape_cast %495 : vector<1x1x1x128xf32> to vector<128xf32>
    %497 = vector.shape_cast %494 : vector<128xf32> to vector<1x1x1x128xf32>
    tpu.vector_store %arg8[%c0_202, %c3_203, %c3_204, %c0_205], %497 {strides = array<i32>} : memref<1x4x4x128xf32, #tpu.memory_space<vmem>>, vector<1x1x1x128xf32>,
    return
  }
  func.func @transform_0(%arg0: i32, %arg1: i32, %arg2: memref<6xi32, #tpu.memory_space<smem>>, %arg3: memref<24xi32, #tpu.memory_space<smem>>, %arg4: memref<24xi32, #tpu.memory_space<smem>>, %arg5: memref<24xi32, #tpu.memory_space<smem>>, %arg6: memref<24xi32, #tpu.memory_space<smem>>) -> (i32, i32, i32, i32) {
    %0 = arith.index_cast %arg1 : i32 to index
    %1 = memref.load %arg2[%0] : memref<6xi32, #tpu.memory_space<smem>>
    %c0_i32 = arith.constant 0 : i32
    %c0_i32_0 = arith.constant 0 : i32
    %c0_i32_1 = arith.constant 0 : i32
    return %1, %c0_i32, %c0_i32_0, %arg0 : i32, i32, i32, i32
  }
  func.func @transform_1(%arg0: i32, %arg1: i32, %arg2: memref<6xi32, #tpu.memory_space<smem>>, %arg3: memref<24xi32, #tpu.memory_space<smem>>, %arg4: memref<24xi32, #tpu.memory_space<smem>>, %arg5: memref<24xi32, #tpu.memory_space<smem>>, %arg6: memref<24xi32, #tpu.memory_space<smem>>) -> (i32, i32, i32, i32) {
    %c0_i32 = arith.constant 0 : i32
    %c0_i32_0 = arith.constant 0 : i32
    %c0_i32_1 = arith.constant 0 : i32
    return %arg1, %c0_i32, %c0_i32_0, %arg0 : i32, i32, i32, i32
  }
}

</mosaic_0001>

<llo_original>
// kernel: tpu_custom_call.1
$region0: #{tpu_custom_call.1}
  #allocation0 [shape = 'u32[]', space=smem, size = 0x4, offset = 0x4, fixed_abs, tag = 'smem constant byte address 0x4 - core index']
  #allocation1 [shape = 'u32[72,128]{1,0:T(1,128)}', space=vmem, size = 0x9000, scoped, tag = 'internal scratch']
  #allocation2 [shape = 's32[1]{0}', space=sflag, size = 0x4, scoped, tag = 'scoped memory for tpu_custom_call.1']
  #allocation3 [shape = 'u8[512]{0}', space=smem, size = 0x200, scoped, tag = 'prefetched SMEM operand 0']
  #allocation4 [shape = 'u8[512]{0}', space=smem, size = 0x200, scoped, tag = 'prefetched SMEM operand 1']
  #allocation5 [shape = 'u8[512]{0}', space=smem, size = 0x200, scoped, tag = 'prefetched SMEM operand 2']
  #allocation6 [shape = 'u8[512]{0}', space=smem, size = 0x200, scoped, tag = 'prefetched SMEM operand 3']
  #allocation7 [shape = 'u8[512]{0}', space=smem, size = 0x200, scoped, tag = 'prefetched SMEM operand 4']
  %s0 = inlined_call_operand.hbm [shape: s32[6], index: 0, kind: input, shape index: {}]
  %s1 = inlined_call_operand.hbm [shape: s32[24], index: 1, kind: input, shape index: {}]
  %s2 = inlined_call_operand.vmem [shape: s32[24], index: 2, kind: input, shape index: {}]
  %s3 = inlined_call_operand.vmem [shape: s32[24], index: 3, kind: input, shape index: {}]
  %s4 = inlined_call_operand.vmem [shape: s32[24], index: 4, kind: input, shape index: {}]
  %s5 = inlined_call_operand.hbm [shape: f32[2,16,16,128], index: 5, kind: input, shape index: {}]
  %s6 = inlined_call_operand.hbm [shape: f32[6,4,4,128], index: 6, kind: output, shape index: {}]
  %s7 = sld [smem:[#allocation0]]
  $region41: #{tpu_custom_call.1} parent=0
    _
  %s9 = ssub.s32 1, %s7
  %s10 = scalar_select 0, %s9, %s7
  %s12 = sshll.u32 %s0, 4
  %s13 = int_to_ptr.hbm [resolvable:$true] %s12
  %15 = dma.hbm_to_smem %s13, 16, [#allocation3], [#allocation2]
  %s17 = sshll.u32 %s1, 4
  %s18 = int_to_ptr.hbm [resolvable:$true] %s17
  %20 = dma.hbm_to_smem %s18, 16, [#allocation4], [#allocation2]
  %s22 = sshll.u32 %s2, 4
  %s23 = int_to_ptr.vmem [resolvable:$true] %s22
  %25 = dma.vmem_to_smem %s23, 16, [#allocation5], [#allocation2]
  %s27 = sshll.u32 %s3, 4
  %s28 = int_to_ptr.vmem [resolvable:$true] %s27
  %30 = dma.vmem_to_smem %s28, 16, [#allocation6], [#allocation2]
  %s32 = sshll.u32 %s4, 4
  %s33 = int_to_ptr.vmem [resolvable:$true] %s32
  %35 = dma.vmem_to_smem %s33, 16, [#allocation7], [#allocation2]
  %37 = dma.done [#allocation2], 80
  %38 = sfence
  $region1: #{tpu_custom_call.1} parent=0
    #allocation8 [shape = 'u8[262144]{0}', space=vmem, size = 0x40000, scoped, tag = 'input window, operand 5']
    #allocation9 [shape = 's32[2]{0}', space=sflag, size = 0x8, scoped, tag = 'scoped memory for tpu_custom_call.1']
    #allocation10 [shape = 's32[2]{0}', space=sflag, size = 0x8, scoped, tag = 'scoped memory for tpu_custom_call.1']
    #allocation11 [shape = 'u8[16384]{0}', space=vmem, size = 0x4000, scoped, tag = 'output window, operand 0']
    %39 = vsyncpa [#allocation9], 0
    %s40 = scalar_lea.sflag [#allocation9], 1
    %41 = vsyncpa %s40, 0
    %42 = vsyncpa [#allocation10], 0
    %s43 = scalar_lea.sflag [#allocation10], 1
    %44 = vsyncpa %s43, 0
    loop: start=0, step=1, limit=8
    $region2: #{tpu_custom_call.1} parent=1 // loop_pre_header
      _
    $region3: #{tpu_custom_call.1} parent=1 // loop_header
      %s46 = sphi 0, %s50
      %p47 = scmp.ge.s32.totalorder %s46, 8
      %s53 = sphi 0, %s65
      %s54 = sphi 0, %s61
      %s55 = sphi 0, %s53
      %s56 = sphi 0, %s54
      %s57 = sphi 0, %s55
      %s58 = sphi 0, %s56
      %s72 = sphi 0, %s74
      %s75 = sphi 0, %s72
      %s76 = sphi 0, %s75
      %s92 = sphi 0, %s76
      %s100 = sphi 0, %s102
      %s103 = sphi 0, %s100
      %s104 = sphi 0, %s103
      %s120 = sphi 0, %s104
    $region4: #{tpu_custom_call.1} parent=1 // loop_header_branch
      %49 = sbr.rel (%p47) target = $region8
    $region5: #{tpu_custom_call.1} parent=1 // loop_body
      %s51 = ssub.s32 %s46, 1
      %s52 = ssub.s32 %s46, 2
      %s59 = sadd.s32 1, %s54
      %p60 = scmp.ge.s32.totalorder %s59, 6
      %s61 = scalar_select %p60, 0, %s59
      %s62 = sadd.s32 1, %s53
      %s63 = scalar_select %p60, %s62, %s53
      %p64 = scmp.ge.s32.totalorder %s63, 1
      %s65 = scalar_select %p64, 0, %s63
      %s66 = sld [smem:[#allocation3 + %s54]]
      %s67 = sld [smem:[#allocation3 + %s61]]
      %s68 = ssub.s32 %s66, %s67
      %s69 = ssub.s32 %s53, %s65
      %s70 = sor.u32 %s68, %s69
      %p71 = scmp.eq.s32.totalorder %s70, 0
      %s73 = sadd.s32 %s72, 1
      %s74 = scalar_select %p71, %s72, %s73
      %p77 = pneg %p71
      %p78 = scmp.eq.s32.totalorder %s46, 5
      %p79 = por %p77, %p78
      %p80 = scmp.ne.s32.totalorder %s72, %s75
      %p81 = scmp.eq.s32.totalorder %s46, 0
      %p82 = por %p80, %p81
      %p83 = scmp.ne.s32.totalorder %s72, %s75
      %p84 = scmp.eq.s32.totalorder %s51, 5
      %p85 = por %p83, %p84
      %p86 = scmp.ne.s32.totalorder %s75, %s76
      %p87 = scmp.eq.s32.totalorder %s51, 0
      %p88 = por %p86, %p87
      %p89 = scmp.ne.s32.totalorder %s75, %s76
      %p90 = scmp.eq.s32.totalorder %s52, 5
      %p91 = por %p89, %p90
      %p93 = scmp.ne.s32.totalorder %s76, %s92
      %p94 = scmp.eq.s32.totalorder %s52, 0
      %p95 = por %p93, %p94
      %s96 = ssub.s32 %s54, %s61
      %s97 = ssub.s32 %s53, %s65
      %s98 = sor.u32 %s96, %s97
      %p99 = scmp.eq.s32.totalorder %s98, 0
      %s101 = sadd.s32 %s100, 1
      %s102 = scalar_select %p99, %s100, %s101
      %p105 = pneg %p99
      %p106 = scmp.eq.s32.totalorder %s46, 5
      %p107 = por %p105, %p106
      %p108 = scmp.ne.s32.totalorder %s100, %s103
      %p109 = scmp.eq.s32.totalorder %s46, 0
      %p110 = por %p108, %p109
      %p111 = scmp.ne.s32.totalorder %s100, %s103
      %p112 = scmp.eq.s32.totalorder %s51, 5
      %p113 = por %p111, %p112
      %p114 = scmp.ne.s32.totalorder %s103, %s104
      %p115 = scmp.eq.s32.totalorder %s51, 0
      %p116 = por %p114, %p115
      %p117 = scmp.ne.s32.totalorder %s103, %s104
      %p118 = scmp.eq.s32.totalorder %s52, 5
      %p119 = por %p117, %p118
      %p121 = scmp.ne.s32.totalorder %s104, %s120
      %p122 = scmp.eq.s32.totalorder %s52, 0
      %p123 = por %p121, %p122
      %p124 = scmp.le.s32.totalorder 1, %s46
      %p125 = scmp.lt.s32.totalorder %s46, 7
      %p126 = pnand %p124, %p125
      %p127 = pneg %p126
      // Predicated region
      $region9: #{tpu_custom_call.1} parent=5 // pred_check
        _
      $region10: #{tpu_custom_call.1} parent=5 // pred_check_branch
        %129 = sbr.rel (%p126) target = $region12
      $region11: #{tpu_custom_call.1} parent=5 // pred_region
        %s130 = ssub.s32 %s46, 1
      $region12: #{tpu_custom_call.1} parent=5 // pred_fallthru
        _
      %p131 = scmp.lt.s32.totalorder %s46, 6
      // Predicated region
      $region13: #{tpu_custom_call.1} parent=5 // pred_check
        %p132 = pneg %p131
      $region14: #{tpu_custom_call.1} parent=5 // pred_check_branch
        %134 = sbr.rel (%p132) target = $region16
      $region15: #{tpu_custom_call.1} parent=5 // pred_region
        // Predicated region
        $region17: #{tpu_custom_call.1} parent=15 // pred_check
          %p135 = pneg %p82
        $region18: #{tpu_custom_call.1} parent=15 // pred_check_branch
          %137 = sbr.rel (%p135) target = $region20
        $region19: #{tpu_custom_call.1} parent=15 // pred_region
          %s138 = sand.u32 %s72, 1
          %s139 = scalar_lea.sflag [#allocation9], %s138
          %s140 = sand.u32 %s72, 1
          %s141 = smul.addr %s140, 256
          %s142 = scalar_lea.vmem [#allocation8], %s141
          %s143 = sld [smem:[#allocation3 + %s54]]
          %145 = vsyncadd %s139, 0
          %s146 = smul.addr %s143, 32
          %s147 = sadd.s32 %s53, %s146
          %s148 = smul.addr %s147, 8
          %s149 = scalar_lea.hbm %s5, %s148
          %s150 = sshll.u32 %s149, 4
          %s151 = int_to_ptr.hbm [resolvable:$true] %s150
          %s152 = sshll.u32 %s142, 4
          %s153 = int_to_ptr.vmem [resolvable:$true] %s152
          %158 = dma.hbm_to_vmem [thread:$0]  %s151, 4096, %s153, %s139, 128, 128, 8
        $region20: #{tpu_custom_call.1} parent=15 // pred_fallthru
          _
      $region16: #{tpu_custom_call.1} parent=5 // pred_fallthru
        _
      %p159 = scmp.le.s32.totalorder 1, %s46
      %p160 = scmp.lt.s32.totalorder %s46, 7
      %p161 = pnand %p159, %p160
      %p162 = pneg %p161
      // Predicated region
      $region21: #{tpu_custom_call.1} parent=5 // pred_check
        _
      $region22: #{tpu_custom_call.1} parent=5 // pred_check_branch
        %164 = sbr.rel (%p161) target = $region24
      $region23: #{tpu_custom_call.1} parent=5 // pred_region
        %s165 = ssub.s32 %s46, 1
        %s166 = sand.u32 %s75, 1
        %s167 = scalar_lea.sflag [#allocation9], %s166
        %s168 = sand.u32 %s75, 1
        %s169 = smul.addr %s168, 256
        %s170 = scalar_lea.vmem [#allocation8], %s169
        // Predicated region
        $region25: #{tpu_custom_call.1} parent=23 // pred_check
          %p171 = pneg %p88
        $region26: #{tpu_custom_call.1} parent=23 // pred_check_branch
          %173 = sbr.rel (%p171) target = $region28
        $region27: #{tpu_custom_call.1} parent=23 // pred_region
          %175 = dma.done %s167, 4096
        $region28: #{tpu_custom_call.1} parent=23 // pred_fallthru
          _
        %s176 = sand.u32 %s75, 1
        %s177 = scalar_lea.sflag [#allocation9], %s176
        %s178 = sand.u32 %s75, 1
        %s179 = smul.addr %s178, 256
        %s180 = scalar_lea.vmem [#allocation8], %s179
        %p181 = pneg %p88
        %p182 = pneg %p85
        %p183 = pneg %p116
        %p184 = pneg %p113
        %s185 = sand.u32 %s103, 1
        %s186 = scalar_lea.sflag [#allocation10], %s185
        %s187 = sand.u32 %s103, 1
        %s188 = smul.addr %s187, 16
        %s189 = scalar_lea.vmem [#allocation11], %s188
        %s190 = sld [smem:[#allocation3 + %s56]]
        %v191 = vlaneseq
        %v192 = vshrl.u32 %v191, 7
        %v193 = vadd.s32 %v192, 8
        %s194 = smul.u32 %s56, 4
        %s195 = sld [smem:[#allocation4 + %s194]]
        %s196 = sld [smem:[#allocation5 + %s194]]
        %v197 = vstv %s195
        %vm198 = vcmp.le.s32.totalorder %v197, 0
        %vm199 = vcmp.le.s32.totalorder %v197, 1
        %vm200 = vcmp.le.s32.totalorder %v197, 2
        %vm201 = vcmp.le.s32.totalorder %v197, 3
        %vm202 = vcmp.le.s32.totalorder %v197, 4
        %vm203 = vcmp.le.s32.totalorder %v197, 5
        %vm204 = vcmp.le.s32.totalorder %v197, 6
        %vm205 = vcmp.le.s32.totalorder %v197, 7
        %vm206 = vcmp.le.s32.totalorder %v197, 8
        %vm207 = vcmp.le.s32.totalorder %v197, 9
        %vm208 = vcmp.le.s32.totalorder %v197, 10
        %vm209 = vcmp.le.s32.totalorder %v197, 11
        %vm210 = vcmp.le.s32.totalorder %v197, 12
        %vm211 = vcmp.le.s32.totalorder %v197, 13
        %vm212 = vcmp.le.s32.totalorder %v197, 14
        %vm213 = vcmp.le.s32.totalorder %v197, 15
        %v214 = vstv %s196
        %vm215 = vcmp.gt.s32.totalorder %v214, 0
        %vm216 = vcmp.gt.s32.totalorder %v214, 1
        %vm217 = vcmp.gt.s32.totalorder %v214, 2
        %vm218 = vcmp.gt.s32.totalorder %v214, 3
        %vm219 = vcmp.gt.s32.totalorder %v214, 4
        %vm220 = vcmp.gt.s32.totalorder %v214, 5
        %vm221 = vcmp.gt.s32.totalorder %v214, 6
        %vm222 = vcmp.gt.s32.totalorder %v214, 7
        %vm223 = vcmp.gt.s32.totalorder %v214, 8
        %vm224 = vcmp.gt.s32.totalorder %v214, 9
        %vm225 = vcmp.gt.s32.totalorder %v214, 10
        %vm226 = vcmp.gt.s32.totalorder %v214, 11
        %vm227 = vcmp.gt.s32.totalorder %v214, 12
        %vm228 = vcmp.gt.s32.totalorder %v214, 13
        %vm229 = vcmp.gt.s32.totalorder %v214, 14
        %vm230 = vcmp.gt.s32.totalorder %v214, 15
        %vm231 = vmand %vm198, %vm215
        %vm232 = vmand %vm199, %vm216
        %vm233 = vmand %vm200, %vm217
        %vm234 = vmand %vm201, %vm218
        %vm235 = vmand %vm202, %vm219
        %vm236 = vmand %vm203, %vm220
        %vm237 = vmand %vm204, %vm221
        %vm238 = vmand %vm205, %vm222
        %vm239 = vmand %vm206, %vm223
        %vm240 = vmand %vm207, %vm224
        %vm241 = vmand %vm208, %vm225
        %vm242 = vmand %vm209, %vm226
        %vm243 = vmand %vm210, %vm227
        %vm244 = vmand %vm211, %vm228
        %vm245 = vmand %vm212, %vm229
        %vm246 = vmand %vm213, %vm230
        %v247 = vld [vmem:[%s170] sm:$0xff]
        %v248 = vld [vmem:[%s170 + $0x8] sm:$0xff]
        %v249 = vld [vmem:[%s170 + $0x10] sm:$0xff]
        %v250 = vld [vmem:[%s170 + $0x18] sm:$0xff]
        %v251 = vld [vmem:[%s170 + $0x20] sm:$0xff]
        %v252 = vld [vmem:[%s170 + $0x28] sm:$0xff]
        %v253 = vld [vmem:[%s170 + $0x30] sm:$0xff]
        %v254 = vld [vmem:[%s170 + $0x38] sm:$0xff]
        %v255 = vld [vmem:[%s170 + $0x40] sm:$0xff]
        %v256 = vld [vmem:[%s170 + $0x48] sm:$0xff]
        %v257 = vld [vmem:[%s170 + $0x50] sm:$0xff]
        %v258 = vld [vmem:[%s170 + $0x58] sm:$0xff]
        %v259 = vld [vmem:[%s170 + $0x60] sm:$0xff]
        %v260 = vld [vmem:[%s170 + $0x68] sm:$0xff]
        %v261 = vld [vmem:[%s170 + $0x70] sm:$0xff]
        %v262 = vld [vmem:[%s170 + $0x78] sm:$0xff]
        %v263 = vld [vmem:[%s170 + $0x80] sm:$0xff]
        %v264 = vld [vmem:[%s170 + $0x88] sm:$0xff]
        %v265 = vld [vmem:[%s170 + $0x90] sm:$0xff]
        %v266 = vld [vmem:[%s170 + $0x98] sm:$0xff]
        %v267 = vld [vmem:[%s170 + $0xa0] sm:$0xff]
        %v268 = vld [vmem:[%s170 + $0xa8] sm:$0xff]
        %v269 = vld [vmem:[%s170 + $0xb0] sm:$0xff]
        %v270 = vld [vmem:[%s170 + $0xb8] sm:$0xff]
        %v271 = vld [vmem:[%s170 + $0xc0] sm:$0xff]
        %v272 = vld [vmem:[%s170 + $0xc8] sm:$0xff]
        %v273 = vld [vmem:[%s170 + $0xd0] sm:$0xff]
        %v274 = vld [vmem:[%s170 + $0xd8] sm:$0xff]
        %v275 = vld [vmem:[%s170 + $0xe0] sm:$0xff]
        %v276 = vld [vmem:[%s170 + $0xe8] sm:$0xff]
        %v277 = vld [vmem:[%s170 + $0xf0] sm:$0xff]
        %v278 = vld [vmem:[%s170 + $0xf8] sm:$0xff]
        %v279 = vsel %vm231, 1, 0
        %v280 = vsel %vm232, 1, 0
        %v281 = vsel %vm233, 1, 0
        %v282 = vsel %vm234, 1, 0
        %v283 = vsel %vm235, 1, 0
        %v284 = vsel %vm236, 1, 0
        %v285 = vsel %vm237, 1, 0
        %v286 = vsel %vm238, 1, 0
        %v287 = vsel %vm239, 1, 0
        %v288 = vsel %vm240, 1, 0
        %v289 = vsel %vm241, 1, 0
        %v290 = vsel %vm242, 1, 0
        %v291 = vsel %vm243, 1, 0
        %v292 = vsel %vm244, 1, 0
        %v293 = vsel %vm245, 1, 0
        %v294 = vsel %vm246, 1, 0
        %vm295 = vcmp.eq.s32.totalorder %v279, 1
        %vm296 = vcmp.eq.s32.totalorder %v280, 1
        %vm297 = vcmp.eq.s32.totalorder %v281, 1
        %vm298 = vcmp.eq.s32.totalorder %v282, 1
        %vm299 = vcmp.eq.s32.totalorder %v283, 1
        %vm300 = vcmp.eq.s32.totalorder %v284, 1
        %vm301 = vcmp.eq.s32.totalorder %v285, 1
        %vm302 = vcmp.eq.s32.totalorder %v286, 1
        %vm303 = vcmp.eq.s32.totalorder %v287, 1
        %vm304 = vcmp.eq.s32.totalorder %v288, 1
        %vm305 = vcmp.eq.s32.totalorder %v289, 1
        %vm306 = vcmp.eq.s32.totalorder %v290, 1
        %vm307 = vcmp.eq.s32.totalorder %v291, 1
        %vm308 = vcmp.eq.s32.totalorder %v292, 1
        %vm309 = vcmp.eq.s32.totalorder %v293, 1
        %vm310 = vcmp.eq.s32.totalorder %v294, 1
        %v311 = vsel %vm295, %v247, -3.4028235e+38
        %v312 = vsel %vm295, %v248, -3.4028235e+38
        %v313 = vsel %vm296, %v249, -3.4028235e+38
        %v314 = vsel %vm296, %v250, -3.4028235e+38
        %v315 = vsel %vm297, %v251, -3.4028235e+38
        %v316 = vsel %vm297, %v252, -3.4028235e+38
        %v317 = vsel %vm298, %v253, -3.4028235e+38
        %v318 = vsel %vm298, %v254, -3.4028235e+38
        %v319 = vsel %vm299, %v255, -3.4028235e+38
        %v320 = vsel %vm299, %v256, -3.4028235e+38
        %v321 = vsel %vm300, %v257, -3.4028235e+38
        %v322 = vsel %vm300, %v258, -3.4028235e+38
        %v323 = vsel %vm301, %v259, -3.4028235e+38
        %v324 = vsel %vm301, %v260, -3.4028235e+38
        %v325 = vsel %vm302, %v261, -3.4028235e+38
        %v326 = vsel %vm302, %v262, -3.4028235e+38
        %v327 = vsel %vm303, %v263, -3.4028235e+38
        %v328 = vsel %vm303, %v264, -3.4028235e+38
        %v329 = vsel %vm304, %v265, -3.4028235e+38
        %v330 = vsel %vm304, %v266, -3.4028235e+38
        %v331 = vsel %vm305, %v267, -3.4028235e+38
        %v332 = vsel %vm305, %v268, -3.4028235e+38
        %v333 = vsel %vm306, %v269, -3.4028235e+38
        %v334 = vsel %vm306, %v270, -3.4028235e+38
        %v335 = vsel %vm307, %v271, -3.4028235e+38
        %v336 = vsel %vm307, %v272, -3.4028235e+38
        %v337 = vsel %vm308, %v273, -3.4028235e+38
        %v338 = vsel %vm308, %v274, -3.4028235e+38
        %v339 = vsel %vm309, %v275, -3.4028235e+38
        %v340 = vsel %vm309, %v276, -3.4028235e+38
        %v341 = vsel %vm310, %v277, -3.4028235e+38
        %v342 = vsel %vm310, %v278, -3.4028235e+38
        %v343 = vmax.f32 %v311, %v315
        %v344 = vmax.f32 %v313, %v317
        %v345 = vmax.f32 %v343, %v319
        %v346 = vmax.f32 %v344, %v321
        %v347 = vmax.f32 %v345, %v323
        %v348 = vmax.f32 %v346, %v325
        %v349 = vmax.f32 %v347, %v327
        %v350 = vmax.f32 %v348, %v329
        %v351 = vmax.f32 %v349, %v331
        %v352 = vmax.f32 %v350, %v333
        %v353 = vmax.f32 %v351, %v335
        %v354 = vmax.f32 %v352, %v337
        %v355 = vmax.f32 %v353, %v339
        %v356 = vmax.f32 %v354, %v341
        %v357 = vmax.f32 %v355, %v356
        %v358 = vmax.f32 %v312, %v316
        %v359 = vmax.f32 %v314, %v318
        %v360 = vmax.f32 %v358, %v320
        %v361 = vmax.f32 %v359, %v322
        %v362 = vmax.f32 %v360, %v324
        %v363 = vmax.f32 %v361, %v326
        %v364 = vmax.f32 %v362, %v328
        %v365 = vmax.f32 %v363, %v330
        %v366 = vmax.f32 %v364, %v332
        %v367 = vmax.f32 %v365, %v334
        %v368 = vmax.f32 %v366, %v336
        %v369 = vmax.f32 %v367, %v338
        %v370 = vmax.f32 %v368, %v340
        %v371 = vmax.f32 %v369, %v342
        %v372 = vmax.f32 %v370, %v371
        %s373 = sld [smem:[#allocation6 + %s194]]
        %s374 = sld [smem:[#allocation7 + %s194]]
        %v375 = vstv %s373
        %vm376 = vcmp.ge.s32.totalorder %v192, %v375
        %vm377 = vcmp.ge.s32.totalorder %v193, %v375
        %v378 = vstv %s374
        %vm379 = vcmp.lt.s32.totalorder %v192, %v378
        %vm380 = vcmp.lt.s32.totalorder %v193, %v378
        %vm381 = vmand %vm376, %vm379
        %vm382 = vmand %vm377, %vm380
        %v383 = vsel %vm381, 1, 0
        %v384 = vsel %vm382, 1, 0
        %vm385 = vcmp.eq.s32.totalorder %v383, 1
        %vm386 = vcmp.eq.s32.totalorder %v384, 1
        %v387 = vsel %vm385, %v357, -3.4028235e+38
        %v388 = vsel %vm386, %v372, -3.4028235e+38
        %v389 = vmax.f32 %v387, %v388
        %v390 = vrot.slane %v389, 4
        %v391 = vmax.f32 %v389, %v390
        %v392 = vrot.slane %v391, 2
        %v393 = vmax.f32 %v391, %v392
        %v394 = vrot.slane %v393, 1
        %v395 = vmax.f32 %v393, %v394
        %p396 = scmp.le.s32.totalorder %s196, %s195
        %p397 = scmp.le.s32.totalorder %s374, %s373
        %p398 = por %p396, %p397
        %s399 = scalar_select %p398, 1, 0
        %v400 = vstv %s399
        %vm401 = vcmp.eq.s32.totalorder %v400, 1
        %v402 = vsel %vm401, 0.0, %v395
        %403 = vst [vmem:[%s189] sm:$0x1] %v402
        %s404 = sadd.s32 %s194, 1
        %s405 = sld [smem:[#allocation6 + %s404]]
        %s406 = sld [smem:[#allocation7 + %s404]]
        %v407 = vstv %s405
        %vm408 = vcmp.ge.s32.totalorder %v192, %v407
        %vm409 = vcmp.ge.s32.totalorder %v193, %v407
        %v410 = vstv %s406
        %vm411 = vcmp.lt.s32.totalorder %v192, %v410
        %vm412 = vcmp.lt.s32.totalorder %v193, %v410
        %vm413 = vmand %vm408, %vm411
        %vm414 = vmand %vm409, %vm412
        %v415 = vsel %vm413, 1, 0
        %v416 = vsel %vm414, 1, 0
        %vm417 = vcmp.eq.s32.totalorder %v415, 1
        %vm418 = vcmp.eq.s32.totalorder %v416, 1
        %v419 = vsel %vm417, %v357, -3.4028235e+38
        %v420 = vsel %vm418, %v372, -3.4028235e+38
        %v421 = vmax.f32 %v419, %v420
        %v422 = vrot.slane %v421, 4
        %v423 = vmax.f32 %v421, %v422
        %v424 = vrot.slane %v423, 2
        %v425 = vmax.f32 %v423, %v424
        %v426 = vrot.slane %v425, 1
        %v427 = vmax.f32 %v425, %v426
        %p428 = scmp.le.s32.totalorder %s406, %s405
        %p429 = por %p396, %p428
        %s430 = scalar_select %p429, 1, 0
        %v431 = vstv %s430
        %vm432 = vcmp.eq.s32.totalorder %v431, 1
        %v433 = vsel %vm432, 0.0, %v427
        %434 = vst [vmem:[%s189 + $0x1] sm:$0x1] %v433
        %s435 = sadd.s32 %s194, 2
        %s436 = sld [smem:[#allocation6 + %s435]]
        %s437 = sld [smem:[#allocation7 + %s435]]
        %v438 = vstv %s436
        %vm439 = vcmp.ge.s32.totalorder %v192, %v438
        %vm440 = vcmp.ge.s32.totalorder %v193, %v438
        %v441 = vstv %s437
        %vm442 = vcmp.lt.s32.totalorder %v192, %v441
        %vm443 = vcmp.lt.s32.totalorder %v193, %v441
        %vm444 = vmand %vm439, %vm442
        %vm445 = vmand %vm440, %vm443
        %v446 = vsel %vm444, 1, 0
        %v447 = vsel %vm445, 1, 0
        %vm448 = vcmp.eq.s32.totalorder %v446, 1
        %vm449 = vcmp.eq.s32.totalorder %v447, 1
        %v450 = vsel %vm448, %v357, -3.4028235e+38
        %v451 = vsel %vm449, %v372, -3.4028235e+38
        %v452 = vmax.f32 %v450, %v451
        %v453 = vrot.slane %v452, 4
        %v454 = vmax.f32 %v452, %v453
        %v455 = vrot.slane %v454, 2
        %v456 = vmax.f32 %v454, %v455
        %v457 = vrot.slane %v456, 1
        %v458 = vmax.f32 %v456, %v457
        %p459 = scmp.le.s32.totalorder %s437, %s436
        %p460 = por %p396, %p459
        %s461 = scalar_select %p460, 1, 0
        %v462 = vstv %s461
        %vm463 = vcmp.eq.s32.totalorder %v462, 1
        %v464 = vsel %vm463, 0.0, %v458
        %465 = vst [vmem:[%s189 + $0x2] sm:$0x1] %v464
        %s466 = sadd.s32 %s194, 3
        %s467 = sld [smem:[#allocation6 + %s466]]
        %s468 = sld [smem:[#allocation7 + %s466]]
        %v469 = vstv %s467
        %vm470 = vcmp.ge.s32.totalorder %v192, %v469
        %vm471 = vcmp.ge.s32.totalorder %v193, %v469
        %v472 = vstv %s468
        %vm473 = vcmp.lt.s32.totalorder %v192, %v472
        %vm474 = vcmp.lt.s32.totalorder %v193, %v472
        %vm475 = vmand %vm470, %vm473
        %vm476 = vmand %vm471, %vm474
        %v477 = vsel %vm475, 1, 0
        %v478 = vsel %vm476, 1, 0
        %vm479 = vcmp.eq.s32.totalorder %v477, 1
        %vm480 = vcmp.eq.s32.totalorder %v478, 1
        %v481 = vsel %vm479, %v357, -3.4028235e+38
        %v482 = vsel %vm480, %v372, -3.4028235e+38
        %v483 = vmax.f32 %v481, %v482
        %v484 = vrot.slane %v483, 4
        %v485 = vmax.f32 %v483, %v484
        %v486 = vrot.slane %v485, 2
        %v487 = vmax.f32 %v485, %v486
        %v488 = vrot.slane %v487, 1
        %v489 = vmax.f32 %v487, %v488
        %p490 = scmp.le.s32.totalorder %s468, %s467
        %p491 = por %p396, %p490
        %s492 = scalar_select %p491, 1, 0
        %v493 = vstv %s492
        %vm494 = vcmp.eq.s32.totalorder %v493, 1
        %v495 = vsel %vm494, 0.0, %v489
        %496 = vst [vmem:[%s189 + $0x3] sm:$0x1] %v495
        %s497 = sld [smem:[#allocation4 + %s404]]
        %s498 = sld [smem:[#allocation5 + %s404]]
        %v499 = vstv %s497
        %vm500 = vcmp.le.s32.totalorder %v499, 0
        %vm501 = vcmp.le.s32.totalorder %v499, 1
        %vm502 = vcmp.le.s32.totalorder %v499, 2
        %vm503 = vcmp.le.s32.totalorder %v499, 3
        %vm504 = vcmp.le.s32.totalorder %v499, 4
        %vm505 = vcmp.le.s32.totalorder %v499, 5
        %vm506 = vcmp.le.s32.totalorder %v499, 6
        %vm507 = vcmp.le.s32.totalorder %v499, 7
        %vm508 = vcmp.le.s32.totalorder %v499, 8
        %vm509 = vcmp.le.s32.totalorder %v499, 9
        %vm510 = vcmp.le.s32.totalorder %v499, 10
        %vm511 = vcmp.le.s32.totalorder %v499, 11
        %vm512 = vcmp.le.s32.totalorder %v499, 12
        %vm513 = vcmp.le.s32.totalorder %v499, 13
        %vm514 = vcmp.le.s32.totalorder %v499, 14
        %vm515 = vcmp.le.s32.totalorder %v499, 15
        %v516 = vstv %s498
        %vm517 = vcmp.gt.s32.totalorder %v516, 0
        %vm518 = vcmp.gt.s32.totalorder %v516, 1
        %vm519 = vcmp.gt.s32.totalorder %v516, 2
        %vm520 = vcmp.gt.s32.totalorder %v516, 3
        %vm521 = vcmp.gt.s32.totalorder %v516, 4
        %vm522 = vcmp.gt.s32.totalorder %v516, 5
        %vm523 = vcmp.gt.s32.totalorder %v516, 6
        %vm524 = vcmp.gt.s32.totalorder %v516, 7
        %vm525 = vcmp.gt.s32.totalorder %v516, 8
        %vm526 = vcmp.gt.s32.totalorder %v516, 9
        %vm527 = vcmp.gt.s32.totalorder %v516, 10
        %vm528 = vcmp.gt.s32.totalorder %v516, 11
        %vm529 = vcmp.gt.s32.totalorder %v516, 12
        %vm530 = vcmp.gt.s32.totalorder %v516, 13
        %vm531 = vcmp.gt.s32.totalorder %v516, 14
        %vm532 = vcmp.gt.s32.totalorder %v516, 15
        %vm533 = vmand %vm500, %vm517
        %vm534 = vmand %vm501, %vm518
        %vm535 = vmand %vm502, %vm519
        %vm536 = vmand %vm503, %vm520
        %vm537 = vmand %vm504, %vm521
        %vm538 = vmand %vm505, %vm522
        %vm539 = vmand %vm506, %vm523
        %vm540 = vmand %vm507, %vm524
        %vm541 = vmand %vm508, %vm525
        %vm542 = vmand %vm509, %vm526
        %vm543 = vmand %vm510, %vm527
        %vm544 = vmand %vm511, %vm528
        %vm545 = vmand %vm512, %vm529
        %vm546 = vmand %vm513, %vm530
        %vm547 = vmand %vm514, %vm531
        %vm548 = vmand %vm515, %vm532
        %v549 = vld [vmem:[%s170] sm:$0xff]
        %v550 = vld [vmem:[%s170 + $0x8] sm:$0xff]
        %v551 = vld [vmem:[%s170 + $0x10] sm:$0xff]
        %v552 = vld [vmem:[%s170 + $0x18] sm:$0xff]
        %v553 = vld [vmem:[%s170 + $0x20] sm:$0xff]
        %v554 = vld [vmem:[%s170 + $0x28] sm:$0xff]
        %v555 = vld [vmem:[%s170 + $0x30] sm:$0xff]
        %v556 = vld [vmem:[%s170 + $0x38] sm:$0xff]
        %v557 = vld [vmem:[%s170 + $0x40] sm:$0xff]
        %v558 = vld [vmem:[%s170 + $0x48] sm:$0xff]
        %v559 = vld [vmem:[%s170 + $0x50] sm:$0xff]
        %v560 = vld [vmem:[%s170 + $0x58] sm:$0xff]
        %v561 = vld [vmem:[%s170 + $0x60] sm:$0xff]
        %v562 = vld [vmem:[%s170 + $0x68] sm:$0xff]
        %v563 = vld [vmem:[%s170 + $0x70] sm:$0xff]
        %v564 = vld [vmem:[%s170 + $0x78] sm:$0xff]
        %v565 = vld [vmem:[%s170 + $0x80] sm:$0xff]
        %v566 = vld [vmem:[%s170 + $0x88] sm:$0xff]
        %v567 = vld [vmem:[%s170 + $0x90] sm:$0xff]
        %v568 = vld [vmem:[%s170 + $0x98] sm:$0xff]
        %v569 = vld [vmem:[%s170 + $0xa0] sm:$0xff]
        %v570 = vld [vmem:[%s170 + $0xa8] sm:$0xff]
        %v571 = vld [vmem:[%s170 + $0xb0] sm:$0xff]
        %v572 = vld [vmem:[%s170 + $0xb8] sm:$0xff]
        %v573 = vld [vmem:[%s170 + $0xc0] sm:$0xff]
        %v574 = vld [vmem:[%s170 + $0xc8] sm:$0xff]
        %v575 = vld [vmem:[%s170 + $0xd0] sm:$0xff]
        %v576 = vld [vmem:[%s170 + $0xd8] sm:$0xff]
        %v577 = vld [vmem:[%s170 + $0xe0] sm:$0xff]
        %v578 = vld [vmem:[%s170 + $0xe8] sm:$0xff]
        %v579 = vld [vmem:[%s170 + $0xf0] sm:$0xff]
        %v580 = vld [vmem:[%s170 + $0xf8] sm:$0xff]
        %v581 = vsel %vm533, 1, 0
        %v582 = vsel %vm534, 1, 0
        %v583 = vsel %vm535, 1, 0
        %v584 = vsel %vm536, 1, 0
        %v585 = vsel %vm537, 1, 0
        %v586 = vsel %vm538, 1, 0
        %v587 = vsel %vm539, 1, 0
        %v588 = vsel %vm540, 1, 0
        %v589 = vsel %vm541, 1, 0
        %v590 = vsel %vm542, 1, 0
        %v591 = vsel %vm543, 1, 0
        %v592 = vsel %vm544, 1, 0
        %v593 = vsel %vm545, 1, 0
        %v594 = vsel %vm546, 1, 0
        %v595 = vsel %vm547, 1, 0
        %v596 = vsel %vm548, 1, 0
        %vm597 = vcmp.eq.s32.totalorder %v581, 1
        %vm598 = vcmp.eq.s32.totalorder %v582, 1
        %vm599 = vcmp.eq.s32.totalorder %v583, 1
        %vm600 = vcmp.eq.s32.totalorder %v584, 1
        %vm601 = vcmp.eq.s32.totalorder %v585, 1
        %vm602 = vcmp.eq.s32.totalorder %v586, 1
        %vm603 = vcmp.eq.s32.totalorder %v587, 1
        %vm604 = vcmp.eq.s32.totalorder %v588, 1
        %vm605 = vcmp.eq.s32.totalorder %v589, 1
        %vm606 = vcmp.eq.s32.totalorder %v590, 1
        %vm607 = vcmp.eq.s32.totalorder %v591, 1
        %vm608 = vcmp.eq.s32.totalorder %v592, 1
        %vm609 = vcmp.eq.s32.totalorder %v593, 1
        %vm610 = vcmp.eq.s32.totalorder %v594, 1
        %vm611 = vcmp.eq.s32.totalorder %v595, 1
        %vm612 = vcmp.eq.s32.totalorder %v596, 1
        %v613 = vsel %vm597, %v549, -3.4028235e+38
        %v614 = vsel %vm597, %v550, -3.4028235e+38
        %v615 = vsel %vm598, %v551, -3.4028235e+38
        %v616 = vsel %vm598, %v552, -3.4028235e+38
        %v617 = vsel %vm599, %v553, -3.4028235e+38
        %v618 = vsel %vm599, %v554, -3.4028235e+38
        %v619 = vsel %vm600, %v555, -3.4028235e+38
        %v620 = vsel %vm600, %v556, -3.4028235e+38
        %v621 = vsel %vm601, %v557, -3.4028235e+38
        %v622 = vsel %vm601, %v558, -3.4028235e+38
        %v623 = vsel %vm602, %v559, -3.4028235e+38
        %v624 = vsel %vm602, %v560, -3.4028235e+38
        %v625 = vsel %vm603, %v561, -3.4028235e+38
        %v626 = vsel %vm603, %v562, -3.4028235e+38
        %v627 = vsel %vm604, %v563, -3.4028235e+38
        %v628 = vsel %vm604, %v564, -3.4028235e+38
        %v629 = vsel %vm605, %v565, -3.4028235e+38
        %v630 = vsel %vm605, %v566, -3.4028235e+38
        %v631 = vsel %vm606, %v567, -3.4028235e+38
        %v632 = vsel %vm606, %v568, -3.4028235e+38
        %v633 = vsel %vm607, %v569, -3.4028235e+38
        %v634 = vsel %vm607, %v570, -3.4028235e+38
        %v635 = vsel %vm608, %v571, -3.4028235e+38
        %v636 = vsel %vm608, %v572, -3.4028235e+38
        %v637 = vsel %vm609, %v573, -3.4028235e+38
        %v638 = vsel %vm609, %v574, -3.4028235e+38
        %v639 = vsel %vm610, %v575, -3.4028235e+38
        %v640 = vsel %vm610, %v576, -3.4028235e+38
        %v641 = vsel %vm611, %v577, -3.4028235e+38
        %v642 = vsel %vm611, %v578, -3.4028235e+38
        %v643 = vsel %vm612, %v579, -3.4028235e+38
        %v644 = vsel %vm612, %v580, -3.4028235e+38
        %v645 = vmax.f32 %v613, %v617
        %v646 = vmax.f32 %v615, %v619
        %v647 = vmax.f32 %v645, %v621
        %v648 = vmax.f32 %v646, %v623
        %v649 = vmax.f32 %v647, %v625
        %v650 = vmax.f32 %v648, %v627
        %v651 = vmax.f32 %v649, %v629
        %v652 = vmax.f32 %v650, %v631
        %v653 = vmax.f32 %v651, %v633
        %v654 = vmax.f32 %v652, %v635
        %v655 = vmax.f32 %v653, %v637
        %v656 = vmax.f32 %v654, %v639
        %v657 = vmax.f32 %v655, %v641
        %v658 = vmax.f32 %v656, %v643
        %v659 = vmax.f32 %v657, %v658
        %v660 = vmax.f32 %v614, %v618
        %v661 = vmax.f32 %v616, %v620
        %v662 = vmax.f32 %v660, %v622
        %v663 = vmax.f32 %v661, %v624
        %v664 = vmax.f32 %v662, %v626
        %v665 = vmax.f32 %v663, %v628
        %v666 = vmax.f32 %v664, %v630
        %v667 = vmax.f32 %v665, %v632
        %v668 = vmax.f32 %v666, %v634
        %v669 = vmax.f32 %v667, %v636
        %v670 = vmax.f32 %v668, %v638
        %v671 = vmax.f32 %v669, %v640
        %v672 = vmax.f32 %v670, %v642
        %v673 = vmax.f32 %v671, %v644
        %v674 = vmax.f32 %v672, %v673
        %s675 = sld [smem:[#allocation6 + %s194]]
        %s676 = sld [smem:[#allocation7 + %s194]]
        %v677 = vstv %s675
        %vm678 = vcmp.ge.s32.totalorder %v192, %v677
        %vm679 = vcmp.ge.s32.totalorder %v193, %v677
        %v680 = vstv %s676
        %vm681 = vcmp.lt.s32.totalorder %v192, %v680
        %vm682 = vcmp.lt.s32.totalorder %v193, %v680
        %vm683 = vmand %vm678, %vm681
        %vm684 = vmand %vm679, %vm682
        %v685 = vsel %vm683, 1, 0
        %v686 = vsel %vm684, 1, 0
        %vm687 = vcmp.eq.s32.totalorder %v685, 1
        %vm688 = vcmp.eq.s32.totalorder %v686, 1
        %v689 = vsel %vm687, %v659, -3.4028235e+38
        %v690 = vsel %vm688, %v674, -3.4028235e+38
        %v691 = vmax.f32 %v689, %v690
        %v692 = vrot.slane %v691, 4
        %v693 = vmax.f32 %v691, %v692
        %v694 = vrot.slane %v693, 2
        %v695 = vmax.f32 %v693, %v694
        %v696 = vrot.slane %v695, 1
        %v697 = vmax.f32 %v695, %v696
        %p698 = scmp.le.s32.totalorder %s498, %s497
        %p699 = scmp.le.s32.totalorder %s676, %s675
        %p700 = por %p698, %p699
        %s701 = scalar_select %p700, 1, 0
        %v702 = vstv %s701
        %vm703 = vcmp.eq.s32.totalorder %v702, 1
        %v704 = vsel %vm703, 0.0, %v697
        %s705 = scalar_lea.vmem %s189, 4 [#allocation11]
        %706 = vst [vmem:[%s705] sm:$0x1] %v704
        %s707 = sld [smem:[#allocation6 + %s404]]
        %s708 = sld [smem:[#allocation7 + %s404]]
        %v709 = vstv %s707
        %vm710 = vcmp.ge.s32.totalorder %v192, %v709
        %vm711 = vcmp.ge.s32.totalorder %v193, %v709
        %v712 = vstv %s708
        %vm713 = vcmp.lt.s32.totalorder %v192, %v712
        %vm714 = vcmp.lt.s32.totalorder %v193, %v712
        %vm715 = vmand %vm710, %vm713
        %vm716 = vmand %vm711, %vm714
        %v717 = vsel %vm715, 1, 0
        %v718 = vsel %vm716, 1, 0
        %vm719 = vcmp.eq.s32.totalorder %v717, 1
        %vm720 = vcmp.eq.s32.totalorder %v718, 1
        %v721 = vsel %vm719, %v659, -3.4028235e+38
        %v722 = vsel %vm720, %v674, -3.4028235e+38
        %v723 = vmax.f32 %v721, %v722
        %v724 = vrot.slane %v723, 4
        %v725 = vmax.f32 %v723, %v724
        %v726 = vrot.slane %v725, 2
        %v727 = vmax.f32 %v725, %v726
        %v728 = vrot.slane %v727, 1
        %v729 = vmax.f32 %v727, %v728
        %p730 = scmp.le.s32.totalorder %s708, %s707
        %p731 = por %p698, %p730
        %s732 = scalar_select %p731, 1, 0
        %v733 = vstv %s732
        %vm734 = vcmp.eq.s32.totalorder %v733, 1
        %v735 = vsel %vm734, 0.0, %v729
        %736 = vst [vmem:[%s705 + $0x1] sm:$0x1] %v735
        %s737 = sld [smem:[#allocation6 + %s435]]
        %s738 = sld [smem:[#allocation7 + %s435]]
        %v739 = vstv %s737
        %vm740 = vcmp.ge.s32.totalorder %v192, %v739
        %vm741 = vcmp.ge.s32.totalorder %v193, %v739
        %v742 = vstv %s738
        %vm743 = vcmp.lt.s32.totalorder %v192, %v742
        %vm744 = vcmp.lt.s32.totalorder %v193, %v742
        %vm745 = vmand %vm740, %vm743
        %vm746 = vmand %vm741, %vm744
        %v747 = vsel %vm745, 1, 0
        %v748 = vsel %vm746, 1, 0
        %vm749 = vcmp.eq.s32.totalorder %v747, 1
        %vm750 = vcmp.eq.s32.totalorder %v748, 1
        %v751 = vsel %vm749, %v659, -3.4028235e+38
        %v752 = vsel %vm750, %v674, -3.4028235e+38
        %v753 = vmax.f32 %v751, %v752
        %v754 = vrot.slane %v753, 4
        %v755 = vmax.f32 %v753, %v754
        %v756 = vrot.slane %v755, 2
        %v757 = vmax.f32 %v755, %v756
        %v758 = vrot.slane %v757, 1
        %v759 = vmax.f32 %v757, %v758
        %p760 = scmp.le.s32.totalorder %s738, %s737
        %p761 = por %p698, %p760
        %s762 = scalar_select %p761, 1, 0
        %v763 = vstv %s762
        %vm764 = vcmp.eq.s32.totalorder %v763, 1
        %v765 = vsel %vm764, 0.0, %v759
        %766 = vst [vmem:[%s705 + $0x2] sm:$0x1] %v765
        %s767 = sld [smem:[#allocation6 + %s466]]
        %s768 = sld [smem:[#allocation7 + %s466]]
        %v769 = vstv %s767
        %vm770 = vcmp.ge.s32.totalorder %v192, %v769
        %vm771 = vcmp.ge.s32.totalorder %v193, %v769
        %v772 = vstv %s768
        %vm773 = vcmp.lt.s32.totalorder %v192, %v772
        %vm774 = vcmp.lt.s32.totalorder %v193, %v772
        %vm775 = vmand %vm770, %vm773
        %vm776 = vmand %vm771, %vm774
        %v777 = vsel %vm775, 1, 0
        %v778 = vsel %vm776, 1, 0
        %vm779 = vcmp.eq.s32.totalorder %v777, 1
        %vm780 = vcmp.eq.s32.totalorder %v778, 1
        %v781 = vsel %vm779, %v659, -3.4028235e+38
        %v782 = vsel %vm780, %v674, -3.4028235e+38
        %v783 = vmax.f32 %v781, %v782
        %v784 = vrot.slane %v783, 4
        %v785 = vmax.f32 %v783, %v784
        %v786 = vrot.slane %v785, 2
        %v787 = vmax.f32 %v785, %v786
        %v788 = vrot.slane %v787, 1
        %v789 = vmax.f32 %v787, %v788
        %p790 = scmp.le.s32.totalorder %s768, %s767
        %p791 = por %p698, %p790
        %s792 = scalar_select %p791, 1, 0
        %v793 = vstv %s792
        %vm794 = vcmp.eq.s32.totalorder %v793, 1
        %v795 = vsel %vm794, 0.0, %v789
        %796 = vst [vmem:[%s705 + $0x3] sm:$0x1] %v795
        %s797 = sld [smem:[#allocation4 + %s435]]
        %s798 = sld [smem:[#allocation5 + %s435]]
        %v799 = vstv %s797
        %vm800 = vcmp.le.s32.totalorder %v799, 0
        %vm801 = vcmp.le.s32.totalorder %v799, 1
        %vm802 = vcmp.le.s32.totalorder %v799, 2
        %vm803 = vcmp.le.s32.totalorder %v799, 3
        %vm804 = vcmp.le.s32.totalorder %v799, 4
        %vm805 = vcmp.le.s32.totalorder %v799, 5
        %vm806 = vcmp.le.s32.totalorder %v799, 6
        %vm807 = vcmp.le.s32.totalorder %v799, 7
        %vm808 = vcmp.le.s32.totalorder %v799, 8
        %vm809 = vcmp.le.s32.totalorder %v799, 9
        %vm810 = vcmp.le.s32.totalorder %v799, 10
        %vm811 = vcmp.le.s32.totalorder %v799, 11
        %vm812 = vcmp.le.s32.totalorder %v799, 12
        %vm813 = vcmp.le.s32.totalorder %v799, 13
        %vm814 = vcmp.le.s32.totalorder %v799, 14
        %vm815 = vcmp.le.s32.totalorder %v799, 15
        %v816 = vstv %s798
        %vm817 = vcmp.gt.s32.totalorder %v816, 0
        %vm818 = vcmp.gt.s32.totalorder %v816, 1
        %vm819 = vcmp.gt.s32.totalorder %v816, 2
        %vm820 = vcmp.gt.s32.totalorder %v816, 3
        %vm821 = vcmp.gt.s32.totalorder %v816, 4
        %vm822 = vcmp.gt.s32.totalorder %v816, 5
        %vm823 = vcmp.gt.s32.totalorder %v816, 6
        %vm824 = vcmp.gt.s32.totalorder %v816, 7
        %vm825 = vcmp.gt.s32.totalorder %v816, 8
        %vm826 = vcmp.gt.s32.totalorder %v816, 9
        %vm827 = vcmp.gt.s32.totalorder %v816, 10
        %vm828 = vcmp.gt.s32.totalorder %v816, 11
        %vm829 = vcmp.gt.s32.totalorder %v816, 12
        %vm830 = vcmp.gt.s32.totalorder %v816, 13
        %vm831 = vcmp.gt.s32.totalorder %v816, 14
        %vm832 = vcmp.gt.s32.totalorder %v816, 15
        %vm833 = vmand %vm800, %vm817
        %vm834 = vmand %vm801, %vm818
        %vm835 = vmand %vm802, %vm819
        %vm836 = vmand %vm803, %vm820
        %vm837 = vmand %vm804, %vm821
        %vm838 = vmand %vm805, %vm822
        %vm839 = vmand %vm806, %vm823
        %vm840 = vmand %vm807, %vm824
        %vm841 = vmand %vm808, %vm825
        %vm842 = vmand %vm809, %vm826
        %vm843 = vmand %vm810, %vm827
        %vm844 = vmand %vm811, %vm828
        %vm845 = vmand %vm812, %vm829
        %vm846 = vmand %vm813, %vm830
        %vm847 = vmand %vm814, %vm831
        %vm848 = vmand %vm815, %vm832
        %v849 = vld [vmem:[%s170] sm:$0xff]
        %v850 = vld [vmem:[%s170 + $0x8] sm:$0xff]
        %v851 = vld [vmem:[%s170 + $0x10] sm:$0xff]
        %v852 = vld [vmem:[%s170 + $0x18] sm:$0xff]
        %v853 = vld [vmem:[%s170 + $0x20] sm:$0xff]
        %v854 = vld [vmem:[%s170 + $0x28] sm:$0xff]
        %v855 = vld [vmem:[%s170 + $0x30] sm:$0xff]
        %v856 = vld [vmem:[%s170 + $0x38] sm:$0xff]
        %v857 = vld [vmem:[%s170 + $0x40] sm:$0xff]
        %v858 = vld [vmem:[%s170 + $0x48] sm:$0xff]
        %v859 = vld [vmem:[%s170 + $0x50] sm:$0xff]
        %v860 = vld [vmem:[%s170 + $0x58] sm:$0xff]
        %v861 = vld [vmem:[%s170 + $0x60] sm:$0xff]
        %v862 = vld [vmem:[%s170 + $0x68] sm:$0xff]
        %v863 = vld [vmem:[%s170 + $0x70] sm:$0xff]
        %v864 = vld [vmem:[%s170 + $0x78] sm:$0xff]
        %v865 = vld [vmem:[%s170 + $0x80] sm:$0xff]
        %v866 = vld [vmem:[%s170 + $0x88] sm:$0xff]
        %v867 = vld [vmem:[%s170 + $0x90] sm:$0xff]
        %v868 = vld [vmem:[%s170 + $0x98] sm:$0xff]
        %v869 = vld [vmem:[%s170 + $0xa0] sm:$0xff]
        %v870 = vld [vmem:[%s170 + $0xa8] sm:$0xff]
        %v871 = vld [vmem:[%s170 + $0xb0] sm:$0xff]
        %v872 = vld [vmem:[%s170 + $0xb8] sm:$0xff]
        %v873 = vld [vmem:[%s170 + $0xc0] sm:$0xff]
        %v874 = vld [vmem:[%s170 + $0xc8] sm:$0xff]
        %v875 = vld [vmem:[%s170 + $0xd0] sm:$0xff]
        %v876 = vld [vmem:[%s170 + $0xd8] sm:$0xff]
        %v877 = vld [vmem:[%s170 + $0xe0] sm:$0xff]
        %v878 = vld [vmem:[%s170 + $0xe8] sm:$0xff]
        %v879 = vld [vmem:[%s170 + $0xf0] sm:$0xff]
        %v880 = vld [vmem:[%s170 + $0xf8] sm:$0xff]
        %v881 = vsel %vm833, 1, 0
        %v882 = vsel %vm834, 1, 0
        %v883 = vsel %vm835, 1, 0
        %v884 = vsel %vm836, 1, 0
        %v885 = vsel %vm837, 1, 0
        %v886 = vsel %vm838, 1, 0
        %v887 = vsel %vm839, 1, 0
        %v888 = vsel %vm840, 1, 0
        %v889 = vsel %vm841, 1, 0
        %v890 = vsel %vm842, 1, 0
        %v891 = vsel %vm843, 1, 0
        %v892 = vsel %vm844, 1, 0
        %v893 = vsel %vm845, 1, 0
        %v894 = vsel %vm846, 1, 0
        %v895 = vsel %vm847, 1, 0
        %v896 = vsel %vm848, 1, 0
        %vm897 = vcmp.eq.s32.totalorder %v881, 1
        %vm898 = vcmp.eq.s32.totalorder %v882, 1
        %vm899 = vcmp.eq.s32.totalorder %v883, 1
        %vm900 = vcmp.eq.s32.totalorder %v884, 1
        %vm901 = vcmp.eq.s32.totalorder %v885, 1
        %vm902 = vcmp.eq.s32.totalorder %v886, 1
        %vm903 = vcmp.eq.s32.totalorder %v887, 1
        %vm904 = vcmp.eq.s32.totalorder %v888, 1
        %vm905 = vcmp.eq.s32.totalorder %v889, 1
        %vm906 = vcmp.eq.s32.totalorder %v890, 1
        %vm907 = vcmp.eq.s32.totalorder %v891, 1
        %vm908 = vcmp.eq.s32.totalorder %v892, 1
        %vm909 = vcmp.eq.s32.totalorder %v893, 1
        %vm910 = vcmp.eq.s32.totalorder %v894, 1
        %vm911 = vcmp.eq.s32.totalorder %v895, 1
        %vm912 = vcmp.eq.s32.totalorder %v896, 1
        %v913 = vsel %vm897, %v849, -3.4028235e+38
        %v914 = vsel %vm897, %v850, -3.4028235e+38
        %v915 = vsel %vm898, %v851, -3.4028235e+38
        %v916 = vsel %vm898, %v852, -3.4028235e+38
        %v917 = vsel %vm899, %v853, -3.4028235e+38
        %v918 = vsel %vm899, %v854, -3.4028235e+38
        %v919 = vsel %vm900, %v855, -3.4028235e+38
        %v920 = vsel %vm900, %v856, -3.4028235e+38
        %v921 = vsel %vm901, %v857, -3.4028235e+38
        %v922 = vsel %vm901, %v858, -3.4028235e+38
        %v923 = vsel %vm902, %v859, -3.4028235e+38
        %v924 = vsel %vm902, %v860, -3.4028235e+38
        %v925 = vsel %vm903, %v861, -3.4028235e+38
        %v926 = vsel %vm903, %v862, -3.4028235e+38
        %v927 = vsel %vm904, %v863, -3.4028235e+38
        %v928 = vsel %vm904, %v864, -3.4028235e+38
        %v929 = vsel %vm905, %v865, -3.4028235e+38
        %v930 = vsel %vm905, %v866, -3.4028235e+38
        %v931 = vsel %vm906, %v867, -3.4028235e+38
        %v932 = vsel %vm906, %v868, -3.4028235e+38
        %v933 = vsel %vm907, %v869, -3.4028235e+38
        %v934 = vsel %vm907, %v870, -3.4028235e+38
        %v935 = vsel %vm908, %v871, -3.4028235e+38
        %v936 = vsel %vm908, %v872, -3.4028235e+38
        %v937 = vsel %vm909, %v873, -3.4028235e+38
        %v938 = vsel %vm909, %v874, -3.4028235e+38
        %v939 = vsel %vm910, %v875, -3.4028235e+38
        %v940 = vsel %vm910, %v876, -3.4028235e+38
        %v941 = vsel %vm911, %v877, -3.4028235e+38
        %v942 = vsel %vm911, %v878, -3.4028235e+38
        %v943 = vsel %vm912, %v879, -3.4028235e+38
        %v944 = vsel %vm912, %v880, -3.4028235e+38
        %v945 = vmax.f32 %v913, %v917
        %v946 = vmax.f32 %v915, %v919
        %v947 = vmax.f32 %v945, %v921
        %v948 = vmax.f32 %v946, %v923
        %v949 = vmax.f32 %v947, %v925
        %v950 = vmax.f32 %v948, %v927
        %v951 = vmax.f32 %v949, %v929
        %v952 = vmax.f32 %v950, %v931
        %v953 = vmax.f32 %v951, %v933
        %v954 = vmax.f32 %v952, %v935
        %v955 = vmax.f32 %v953, %v937
        %v956 = vmax.f32 %v954, %v939
        %v957 = vmax.f32 %v955, %v941
        %v958 = vmax.f32 %v956, %v943
        %v959 = vmax.f32 %v957, %v958
        %v960 = vmax.f32 %v914, %v918
        %v961 = vmax.f32 %v916, %v920
        %v962 = vmax.f32 %v960, %v922
        %v963 = vmax.f32 %v961, %v924
        %v964 = vmax.f32 %v962, %v926
        %v965 = vmax.f32 %v963, %v928
        %v966 = vmax.f32 %v964, %v930
        %v967 = vmax.f32 %v965, %v932
        %v968 = vmax.f32 %v966, %v934
        %v969 = vmax.f32 %v967, %v936
        %v970 = vmax.f32 %v968, %v938
        %v971 = vmax.f32 %v969, %v940
        %v972 = vmax.f32 %v970, %v942
        %v973 = vmax.f32 %v971, %v944
        %v974 = vmax.f32 %v972, %v973
        %s975 = sld [smem:[#allocation6 + %s194]]
        %s976 = sld [smem:[#allocation7 + %s194]]
        %v977 = vstv %s975
        %vm978 = vcmp.ge.s32.totalorder %v192, %v977
        %vm979 = vcmp.ge.s32.totalorder %v193, %v977
        %v980 = vstv %s976
        %vm981 = vcmp.lt.s32.totalorder %v192, %v980
        %vm982 = vcmp.lt.s32.totalorder %v193, %v980
        %vm983 = vmand %vm978, %vm981
        %vm984 = vmand %vm979, %vm982
        %v985 = vsel %vm983, 1, 0
        %v986 = vsel %vm984, 1, 0
        %vm987 = vcmp.eq.s32.totalorder %v985, 1
        %vm988 = vcmp.eq.s32.totalorder %v986, 1
        %v989 = vsel %vm987, %v959, -3.4028235e+38
        %v990 = vsel %vm988, %v974, -3.4028235e+38
        %v991 = vmax.f32 %v989, %v990
        %v992 = vrot.slane %v991, 4
        %v993 = vmax.f32 %v991, %v992
        %v994 = vrot.slane %v993, 2
        %v995 = vmax.f32 %v993, %v994
        %v996 = vrot.slane %v995, 1
        %v997 = vmax.f32 %v995, %v996
        %p998 = scmp.le.s32.totalorder %s798, %s797
        %p999 = scmp.le.s32.totalorder %s976, %s975
        %p1000 = por %p998, %p999
        %s1001 = scalar_select %p1000, 1, 0
        %v1002 = vstv %s1001
        %vm1003 = vcmp.eq.s32.totalorder %v1002, 1
        %v1004 = vsel %vm1003, 0.0, %v997
        %s1005 = scalar_lea.vmem %s189, 8 [#allocation11]
        %1006 = vst [vmem:[%s1005] sm:$0x1] %v1004
        %s1007 = sld [smem:[#allocation6 + %s404]]
        %s1008 = sld [smem:[#allocation7 + %s404]]
        %v1009 = vstv %s1007
        %vm1010 = vcmp.ge.s32.totalorder %v192, %v1009
        %vm1011 = vcmp.ge.s32.totalorder %v193, %v1009
        %v1012 = vstv %s1008
        %vm1013 = vcmp.lt.s32.totalorder %v192, %v1012
        %vm1014 = vcmp.lt.s32.totalorder %v193, %v1012
        %vm1015 = vmand %vm1010, %vm1013
        %vm1016 = vmand %vm1011, %vm1014
        %v1017 = vsel %vm1015, 1, 0
        %v1018 = vsel %vm1016, 1, 0
        %vm1019 = vcmp.eq.s32.totalorder %v1017, 1
        %vm1020 = vcmp.eq.s32.totalorder %v1018, 1
        %v1021 = vsel %vm1019, %v959, -3.4028235e+38
        %v1022 = vsel %vm1020, %v974, -3.4028235e+38
        %v1023 = vmax.f32 %v1021, %v1022
        %v1024 = vrot.slane %v1023, 4
        %v1025 = vmax.f32 %v1023, %v1024
        %v1026 = vrot.slane %v1025, 2
        %v1027 = vmax.f32 %v1025, %v1026
        %v1028 = vrot.slane %v1027, 1
        %v1029 = vmax.f32 %v1027, %v1028
        %p1030 = scmp.le.s32.totalorder %s1008, %s1007
        %p1031 = por %p998, %p1030
        %s1032 = scalar_select %p1031, 1, 0
        %v1033 = vstv %s1032
        %vm1034 = vcmp.eq.s32.totalorder %v1033, 1
        %v1035 = vsel %vm1034, 0.0, %v1029
        %1036 = vst [vmem:[%s1005 + $0x1] sm:$0x1] %v1035
        %s1037 = sld [smem:[#allocation6 + %s435]]
        %s1038 = sld [smem:[#allocation7 + %s435]]
        %v1039 = vstv %s1037
        %vm1040 = vcmp.ge.s32.totalorder %v192, %v1039
        %vm1041 = vcmp.ge.s32.totalorder %v193, %v1039
        %v1042 = vstv %s1038
        %vm1043 = vcmp.lt.s32.totalorder %v192, %v1042
        %vm1044 = vcmp.lt.s32.totalorder %v193, %v1042
        %vm1045 = vmand %vm1040, %vm1043
        %vm1046 = vmand %vm1041, %vm1044
        %v1047 = vsel %vm1045, 1, 0
        %v1048 = vsel %vm1046, 1, 0
        %vm1049 = vcmp.eq.s32.totalorder %v1047, 1
        %vm1050 = vcmp.eq.s32.totalorder %v1048, 1
        %v1051 = vsel %vm1049, %v959, -3.4028235e+38
        %v1052 = vsel %vm1050, %v974, -3.4028235e+38
        %v1053 = vmax.f32 %v1051, %v1052
        %v1054 = vrot.slane %v1053, 4
        %v1055 = vmax.f32 %v1053, %v1054
        %v1056 = vrot.slane %v1055, 2
        %v1057 = vmax.f32 %v1055, %v1056
        %v1058 = vrot.slane %v1057, 1
        %v1059 = vmax.f32 %v1057, %v1058
        %p1060 = scmp.le.s32.totalorder %s1038, %s1037
        %p1061 = por %p998, %p1060
        %s1062 = scalar_select %p1061, 1, 0
        %v1063 = vstv %s1062
        %vm1064 = vcmp.eq.s32.totalorder %v1063, 1
        %v1065 = vsel %vm1064, 0.0, %v1059
        %1066 = vst [vmem:[%s1005 + $0x2] sm:$0x1] %v1065
        %s1067 = sld [smem:[#allocation6 + %s466]]
        %s1068 = sld [smem:[#allocation7 + %s466]]
        %v1069 = vstv %s1067
        %vm1070 = vcmp.ge.s32.totalorder %v192, %v1069
        %vm1071 = vcmp.ge.s32.totalorder %v193, %v1069
        %v1072 = vstv %s1068
        %vm1073 = vcmp.lt.s32.totalorder %v192, %v1072
        %vm1074 = vcmp.lt.s32.totalorder %v193, %v1072
        %vm1075 = vmand %vm1070, %vm1073
        %vm1076 = vmand %vm1071, %vm1074
        %v1077 = vsel %vm1075, 1, 0
        %v1078 = vsel %vm1076, 1, 0
        %vm1079 = vcmp.eq.s32.totalorder %v1077, 1
        %vm1080 = vcmp.eq.s32.totalorder %v1078, 1
        %v1081 = vsel %vm1079, %v959, -3.4028235e+38
        %v1082 = vsel %vm1080, %v974, -3.4028235e+38
        %v1083 = vmax.f32 %v1081, %v1082
        %v1084 = vrot.slane %v1083, 4
        %v1085 = vmax.f32 %v1083, %v1084
        %v1086 = vrot.slane %v1085, 2
        %v1087 = vmax.f32 %v1085, %v1086
        %v1088 = vrot.slane %v1087, 1
        %v1089 = vmax.f32 %v1087, %v1088
        %p1090 = scmp.le.s32.totalorder %s1068, %s1067
        %p1091 = por %p998, %p1090
        %s1092 = scalar_select %p1091, 1, 0
        %v1093 = vstv %s1092
        %vm1094 = vcmp.eq.s32.totalorder %v1093, 1
        %v1095 = vsel %vm1094, 0.0, %v1089
        %1096 = vst [vmem:[%s1005 + $0x3] sm:$0x1] %v1095
        %s1097 = sld [smem:[#allocation4 + %s466]]
        %s1098 = sld [smem:[#allocation5 + %s466]]
        %v1099 = vstv %s1097
        %vm1100 = vcmp.le.s32.totalorder %v1099, 0
        %vm1101 = vcmp.le.s32.totalorder %v1099, 1
        %vm1102 = vcmp.le.s32.totalorder %v1099, 2
        %vm1103 = vcmp.le.s32.totalorder %v1099, 3
        %vm1104 = vcmp.le.s32.totalorder %v1099, 4
        %vm1105 = vcmp.le.s32.totalorder %v1099, 5
        %vm1106 = vcmp.le.s32.totalorder %v1099, 6
        %vm1107 = vcmp.le.s32.totalorder %v1099, 7
        %vm1108 = vcmp.le.s32.totalorder %v1099, 8
        %vm1109 = vcmp.le.s32.totalorder %v1099, 9
        %vm1110 = vcmp.le.s32.totalorder %v1099, 10
        %vm1111 = vcmp.le.s32.totalorder %v1099, 11
        %vm1112 = vcmp.le.s32.totalorder %v1099, 12
        %vm1113 = vcmp.le.s32.totalorder %v1099, 13
        %vm1114 = vcmp.le.s32.totalorder %v1099, 14
        %vm1115 = vcmp.le.s32.totalorder %v1099, 15
        %v1116 = vstv %s1098
        %vm1117 = vcmp.gt.s32.totalorder %v1116, 0
        %vm1118 = vcmp.gt.s32.totalorder %v1116, 1
        %vm1119 = vcmp.gt.s32.totalorder %v1116, 2
        %vm1120 = vcmp.gt.s32.totalorder %v1116, 3
        %vm1121 = vcmp.gt.s32.totalorder %v1116, 4
        %vm1122 = vcmp.gt.s32.totalorder %v1116, 5
        %vm1123 = vcmp.gt.s32.totalorder %v1116, 6
        %vm1124 = vcmp.gt.s32.totalorder %v1116, 7
        %vm1125 = vcmp.gt.s32.totalorder %v1116, 8
        %vm1126 = vcmp.gt.s32.totalorder %v1116, 9
        %vm1127 = vcmp.gt.s32.totalorder %v1116, 10
        %vm1128 = vcmp.gt.s32.totalorder %v1116, 11
        %vm1129 = vcmp.gt.s32.totalorder %v1116, 12
        %vm1130 = vcmp.gt.s32.totalorder %v1116, 13
        %vm1131 = vcmp.gt.s32.totalorder %v1116, 14
        %vm1132 = vcmp.gt.s32.totalorder %v1116, 15
        %vm1133 = vmand %vm1100, %vm1117
        %vm1134 = vmand %vm1101, %vm1118
        %vm1135 = vmand %vm1102, %vm1119
        %vm1136 = vmand %vm1103, %vm1120
        %vm1137 = vmand %vm1104, %vm1121
        %vm1138 = vmand %vm1105, %vm1122
        %vm1139 = vmand %vm1106, %vm1123
        %vm1140 = vmand %vm1107, %vm1124
        %vm1141 = vmand %vm1108, %vm1125
        %vm1142 = vmand %vm1109, %vm1126
        %vm1143 = vmand %vm1110, %vm1127
        %vm1144 = vmand %vm1111, %vm1128
        %vm1145 = vmand %vm1112, %vm1129
        %vm1146 = vmand %vm1113, %vm1130
        %vm1147 = vmand %vm1114, %vm1131
        %vm1148 = vmand %vm1115, %vm1132
        %v1149 = vld [vmem:[%s170] sm:$0xff]
        %v1150 = vld [vmem:[%s170 + $0x8] sm:$0xff]
        %v1151 = vld [vmem:[%s170 + $0x10] sm:$0xff]
        %v1152 = vld [vmem:[%s170 + $0x18] sm:$0xff]
        %v1153 = vld [vmem:[%s170 + $0x20] sm:$0xff]
        %v1154 = vld [vmem:[%s170 + $0x28] sm:$0xff]
        %v1155 = vld [vmem:[%s170 + $0x30] sm:$0xff]
        %v1156 = vld [vmem:[%s170 + $0x38] sm:$0xff]
        %v1157 = vld [vmem:[%s170 + $0x40] sm:$0xff]
        %v1158 = vld [vmem:[%s170 + $0x48] sm:$0xff]
        %v1159 = vld [vmem:[%s170 + $0x50] sm:$0xff]
        %v1160 = vld [vmem:[%s170 + $0x58] sm:$0xff]
        %v1161 = vld [vmem:[%s170 + $0x60] sm:$0xff]
        %v1162 = vld [vmem:[%s170 + $0x68] sm:$0xff]
        %v1163 = vld [vmem:[%s170 + $0x70] sm:$0xff]
        %v1164 = vld [vmem:[%s170 + $0x78] sm:$0xff]
        %v1165 = vld [vmem:[%s170 + $0x80] sm:$0xff]
        %v1166 = vld [vmem:[%s170 + $0x88] sm:$0xff]
        %v1167 = vld [vmem:[%s170 + $0x90] sm:$0xff]
        %v1168 = vld [vmem:[%s170 + $0x98] sm:$0xff]
        %v1169 = vld [vmem:[%s170 + $0xa0] sm:$0xff]
        %v1170 = vld [vmem:[%s170 + $0xa8] sm:$0xff]
        %v1171 = vld [vmem:[%s170 + $0xb0] sm:$0xff]
        %v1172 = vld [vmem:[%s170 + $0xb8] sm:$0xff]
        %v1173 = vld [vmem:[%s170 + $0xc0] sm:$0xff]
        %v1174 = vld [vmem:[%s170 + $0xc8] sm:$0xff]
        %v1175 = vld [vmem:[%s170 + $0xd0] sm:$0xff]
        %v1176 = vld [vmem:[%s170 + $0xd8] sm:$0xff]
        %v1177 = vld [vmem:[%s170 + $0xe0] sm:$0xff]
        %v1178 = vld [vmem:[%s170 + $0xe8] sm:$0xff]
        %v1179 = vld [vmem:[%s170 + $0xf0] sm:$0xff]
        %v1180 = vld [vmem:[%s170 + $0xf8] sm:$0xff]
        %v1181 = vsel %vm1133, 1, 0
        %v1182 = vsel %vm1134, 1, 0
        %v1183 = vsel %vm1135, 1, 0
        %v1184 = vsel %vm1136, 1, 0
        %v1185 = vsel %vm1137, 1, 0
        %v1186 = vsel %vm1138, 1, 0
        %v1187 = vsel %vm1139, 1, 0
        %v1188 = vsel %vm1140, 1, 0
        %v1189 = vsel %vm1141, 1, 0
        %v1190 = vsel %vm1142, 1, 0
        %v1191 = vsel %vm1143, 1, 0
        %v1192 = vsel %vm1144, 1, 0
        %v1193 = vsel %vm1145, 1, 0
        %v1194 = vsel %vm1146, 1, 0
        %v1195 = vsel %vm1147, 1, 0
        %v1196 = vsel %vm1148, 1, 0
        %vm1197 = vcmp.eq.s32.totalorder %v1181, 1
        %vm1198 = vcmp.eq.s32.totalorder %v1182, 1
        %vm1199 = vcmp.eq.s32.totalorder %v1183, 1
        %vm1200 = vcmp.eq.s32.totalorder %v1184, 1
        %vm1201 = vcmp.eq.s32.totalorder %v1185, 1
        %vm1202 = vcmp.eq.s32.totalorder %v1186, 1
        %vm1203 = vcmp.eq.s32.totalorder %v1187, 1
        %vm1204 = vcmp.eq.s32.totalorder %v1188, 1
        %vm1205 = vcmp.eq.s32.totalorder %v1189, 1
        %vm1206 = vcmp.eq.s32.totalorder %v1190, 1
        %vm1207 = vcmp.eq.s32.totalorder %v1191, 1
        %vm1208 = vcmp.eq.s32.totalorder %v1192, 1
        %vm1209 = vcmp.eq.s32.totalorder %v1193, 1
        %vm1210 = vcmp.eq.s32.totalorder %v1194, 1
        %vm1211 = vcmp.eq.s32.totalorder %v1195, 1
        %vm1212 = vcmp.eq.s32.totalorder %v1196, 1
        %v1213 = vsel %vm1197, %v1149, -3.4028235e+38
        %v1214 = vsel %vm1197, %v1150, -3.4028235e+38
        %v1215 = vsel %vm1198, %v1151, -3.4028235e+38
        %v1216 = vsel %vm1198, %v1152, -3.4028235e+38
        %v1217 = vsel %vm1199, %v1153, -3.4028235e+38
        %v1218 = vsel %vm1199, %v1154, -3.4028235e+38
        %v1219 = vsel %vm1200, %v1155, -3.4028235e+38
        %v1220 = vsel %vm1200, %v1156, -3.4028235e+38
        %v1221 = vsel %vm1201, %v1157, -3.4028235e+38
        %v1222 = vsel %vm1201, %v1158, -3.4028235e+38
        %v1223 = vsel %vm1202, %v1159, -3.4028235e+38
        %v1224 = vsel %vm1202, %v1160, -3.4028235e+38
        %v1225 = vsel %vm1203, %v1161, -3.4028235e+38
        %v1226 = vsel %vm1203, %v1162, -3.4028235e+38
        %v1227 = vsel %vm1204, %v1163, -3.4028235e+38
        %v1228 = vsel %vm1204, %v1164, -3.4028235e+38
        %v1229 = vsel %vm1205, %v1165, -3.4028235e+38
        %v1230 = vsel %vm1205, %v1166, -3.4028235e+38
        %v1231 = vsel %vm1206, %v1167, -3.4028235e+38
        %v1232 = vsel %vm1206, %v1168, -3.4028235e+38
        %v1233 = vsel %vm1207, %v1169, -3.4028235e+38
        %v1234 = vsel %vm1207, %v1170, -3.4028235e+38
        %v1235 = vsel %vm1208, %v1171, -3.4028235e+38
        %v1236 = vsel %vm1208, %v1172, -3.4028235e+38
        %v1237 = vsel %vm1209, %v1173, -3.4028235e+38
        %v1238 = vsel %vm1209, %v1174, -3.4028235e+38
        %v1239 = vsel %vm1210, %v1175, -3.4028235e+38
        %v1240 = vsel %vm1210, %v1176, -3.4028235e+38
        %v1241 = vsel %vm1211, %v1177, -3.4028235e+38
        %v1242 = vsel %vm1211, %v1178, -3.4028235e+38
        %v1243 = vsel %vm1212, %v1179, -3.4028235e+38
        %v1244 = vsel %vm1212, %v1180, -3.4028235e+38
        %v1245 = vmax.f32 %v1213, %v1217
        %v1246 = vmax.f32 %v1215, %v1219
        %v1247 = vmax.f32 %v1245, %v1221
        %v1248 = vmax.f32 %v1246, %v1223
        %v1249 = vmax.f32 %v1247, %v1225
        %v1250 = vmax.f32 %v1248, %v1227
        %v1251 = vmax.f32 %v1249, %v1229
        %v1252 = vmax.f32 %v1250, %v1231
        %v1253 = vmax.f32 %v1251, %v1233
        %v1254 = vmax.f32 %v1252, %v1235
        %v1255 = vmax.f32 %v1253, %v1237
        %v1256 = vmax.f32 %v1254, %v1239
        %v1257 = vmax.f32 %v1255, %v1241
        %v1258 = vmax.f32 %v1256, %v1243
        %v1259 = vmax.f32 %v1257, %v1258
        %v1260 = vmax.f32 %v1214, %v1218
        %v1261 = vmax.f32 %v1216, %v1220
        %v1262 = vmax.f32 %v1260, %v1222
        %v1263 = vmax.f32 %v1261, %v1224
        %v1264 = vmax.f32 %v1262, %v1226
        %v1265 = vmax.f32 %v1263, %v1228
        %v1266 = vmax.f32 %v1264, %v1230
        %v1267 = vmax.f32 %v1265, %v1232
        %v1268 = vmax.f32 %v1266, %v1234
        %v1269 = vmax.f32 %v1267, %v1236
        %v1270 = vmax.f32 %v1268, %v1238
        %v1271 = vmax.f32 %v1269, %v1240
        %v1272 = vmax.f32 %v1270, %v1242
        %v1273 = vmax.f32 %v1271, %v1244
        %v1274 = vmax.f32 %v1272, %v1273
        %s1275 = sld [smem:[#allocation6 + %s194]]
        %s1276 = sld [smem:[#allocation7 + %s194]]
        %v1277 = vstv %s1275
        %vm1278 = vcmp.ge.s32.totalorder %v192, %v1277
        %vm1279 = vcmp.ge.s32.totalorder %v193, %v1277
        %v1280 = vstv %s1276
        %vm1281 = vcmp.lt.s32.totalorder %v192, %v1280
        %vm1282 = vcmp.lt.s32.totalorder %v193, %v1280
        %vm1283 = vmand %vm1278, %vm1281
        %vm1284 = vmand %vm1279, %vm1282
        %v1285 = vsel %vm1283, 1, 0
        %v1286 = vsel %vm1284, 1, 0
        %vm1287 = vcmp.eq.s32.totalorder %v1285, 1
        %vm1288 = vcmp.eq.s32.totalorder %v1286, 1
        %v1289 = vsel %vm1287, %v1259, -3.4028235e+38
        %v1290 = vsel %vm1288, %v1274, -3.4028235e+38
        %v1291 = vmax.f32 %v1289, %v1290
        %v1292 = vrot.slane %v1291, 4
        %v1293 = vmax.f32 %v1291, %v1292
        %v1294 = vrot.slane %v1293, 2
        %v1295 = vmax.f32 %v1293, %v1294
        %v1296 = vrot.slane %v1295, 1
        %v1297 = vmax.f32 %v1295, %v1296
        %p1298 = scmp.le.s32.totalorder %s1098, %s1097
        %p1299 = scmp.le.s32.totalorder %s1276, %s1275
        %p1300 = por %p1298, %p1299
        %s1301 = scalar_select %p1300, 1, 0
        %v1302 = vstv %s1301
        %vm1303 = vcmp.eq.s32.totalorder %v1302, 1
        %v1304 = vsel %vm1303, 0.0, %v1297
        %s1305 = scalar_lea.vmem %s189, 12 [#allocation11]
        %1306 = vst [vmem:[%s1305] sm:$0x1] %v1304
        %s1307 = sld [smem:[#allocation6 + %s404]]
        %s1308 = sld [smem:[#allocation7 + %s404]]
        %v1309 = vstv %s1307
        %vm1310 = vcmp.ge.s32.totalorder %v192, %v1309
        %vm1311 = vcmp.ge.s32.totalorder %v193, %v1309
        %v1312 = vstv %s1308
        %vm1313 = vcmp.lt.s32.totalorder %v192, %v1312
        %vm1314 = vcmp.lt.s32.totalorder %v193, %v1312
        %vm1315 = vmand %vm1310, %vm1313
        %vm1316 = vmand %vm1311, %vm1314
        %v1317 = vsel %vm1315, 1, 0
        %v1318 = vsel %vm1316, 1, 0
        %vm1319 = vcmp.eq.s32.totalorder %v1317, 1
        %vm1320 = vcmp.eq.s32.totalorder %v1318, 1
        %v1321 = vsel %vm1319, %v1259, -3.4028235e+38
        %v1322 = vsel %vm1320, %v1274, -3.4028235e+38
        %v1323 = vmax.f32 %v1321, %v1322
        %v1324 = vrot.slane %v1323, 4
        %v1325 = vmax.f32 %v1323, %v1324
        %v1326 = vrot.slane %v1325, 2
        %v1327 = vmax.f32 %v1325, %v1326
        %v1328 = vrot.slane %v1327, 1
        %v1329 = vmax.f32 %v1327, %v1328
        %p1330 = scmp.le.s32.totalorder %s1308, %s1307
        %p1331 = por %p1298, %p1330
        %s1332 = scalar_select %p1331, 1, 0
        %v1333 = vstv %s1332
        %vm1334 = vcmp.eq.s32.totalorder %v1333, 1
        %v1335 = vsel %vm1334, 0.0, %v1329
        %1336 = vst [vmem:[%s1305 + $0x1] sm:$0x1] %v1335
        %s1337 = sld [smem:[#allocation6 + %s435]]
        %s1338 = sld [smem:[#allocation7 + %s435]]
        %v1339 = vstv %s1337
        %vm1340 = vcmp.ge.s32.totalorder %v192, %v1339
        %vm1341 = vcmp.ge.s32.totalorder %v193, %v1339
        %v1342 = vstv %s1338
        %vm1343 = vcmp.lt.s32.totalorder %v192, %v1342
        %vm1344 = vcmp.lt.s32.totalorder %v193, %v1342
        %vm1345 = vmand %vm1340, %vm1343
        %vm1346 = vmand %vm1341, %vm1344
        %v1347 = vsel %vm1345, 1, 0
        %v1348 = vsel %vm1346, 1, 0
        %vm1349 = vcmp.eq.s32.totalorder %v1347, 1
        %vm1350 = vcmp.eq.s32.totalorder %v1348, 1
        %v1351 = vsel %vm1349, %v1259, -3.4028235e+38
        %v1352 = vsel %vm1350, %v1274, -3.4028235e+38
        %v1353 = vmax.f32 %v1351, %v1352
        %v1354 = vrot.slane %v1353, 4
        %v1355 = vmax.f32 %v1353, %v1354
        %v1356 = vrot.slane %v1355, 2
        %v1357 = vmax.f32 %v1355, %v1356
        %v1358 = vrot.slane %v1357, 1
        %v1359 = vmax.f32 %v1357, %v1358
        %p1360 = scmp.le.s32.totalorder %s1338, %s1337
        %p1361 = por %p1298, %p1360
        %s1362 = scalar_select %p1361, 1, 0
        %v1363 = vstv %s1362
        %vm1364 = vcmp.eq.s32.totalorder %v1363, 1
        %v1365 = vsel %vm1364, 0.0, %v1359
        %1366 = vst [vmem:[%s1305 + $0x2] sm:$0x1] %v1365
        %s1367 = sld [smem:[#allocation6 + %s466]]
        %s1368 = sld [smem:[#allocation7 + %s466]]
        %v1369 = vstv %s1367
        %vm1370 = vcmp.ge.s32.totalorder %v192, %v1369
        %vm1371 = vcmp.ge.s32.totalorder %v193, %v1369
        %v1372 = vstv %s1368
        %vm1373 = vcmp.lt.s32.totalorder %v192, %v1372
        %vm1374 = vcmp.lt.s32.totalorder %v193, %v1372
        %vm1375 = vmand %vm1370, %vm1373
        %vm1376 = vmand %vm1371, %vm1374
        %v1377 = vsel %vm1375, 1, 0
        %v1378 = vsel %vm1376, 1, 0
        %vm1379 = vcmp.eq.s32.totalorder %v1377, 1
        %vm1380 = vcmp.eq.s32.totalorder %v1378, 1
        %v1381 = vsel %vm1379, %v1259, -3.4028235e+38
        %v1382 = vsel %vm1380, %v1274, -3.4028235e+38
        %v1383 = vmax.f32 %v1381, %v1382
        %v1384 = vrot.slane %v1383, 4
        %v1385 = vmax.f32 %v1383, %v1384
        %v1386 = vrot.slane %v1385, 2
        %v1387 = vmax.f32 %v1385, %v1386
        %v1388 = vrot.slane %v1387, 1
        %v1389 = vmax.f32 %v1387, %v1388
        %p1390 = scmp.le.s32.totalorder %s1368, %s1367
        %p1391 = por %p1298, %p1390
        %s1392 = scalar_select %p1391, 1, 0
        %v1393 = vstv %s1392
        %vm1394 = vcmp.eq.s32.totalorder %v1393, 1
        %v1395 = vsel %vm1394, 0.0, %v1389
        %1396 = vst [vmem:[%s1305 + $0x3] sm:$0x1] %v1395
        %s1397 = sand.u32 %s103, 1
        %s1398 = scalar_lea.sflag [#allocation10], %s1397
        %s1399 = sand.u32 %s103, 1
        %s1400 = smul.addr %s1399, 16
        %s1401 = scalar_lea.vmem [#allocation11], %s1400
        // Predicated region
        $region29: #{tpu_custom_call.1} parent=23 // pred_check
          %p1402 = pneg %p113
        $region30: #{tpu_custom_call.1} parent=23 // pred_check_branch
          %1404 = sbr.rel (%p1402) target = $region32
        $region31: #{tpu_custom_call.1} parent=23 // pred_region
          %1406 = vsyncadd %s1398, 0
          %s1407 = smul.addr %s56, 4
          %s1408 = sadd.s32 %s55, %s1407
          %s1409 = smul.addr %s1408, 4
          %s1410 = scalar_lea.hbm %s6, %s1409
          %s1411 = sshll.u32 %s1401, 4
          %s1412 = int_to_ptr.vmem [resolvable:$true] %s1411
          %s1413 = sshll.u32 %s1410, 4
          %s1414 = int_to_ptr.hbm [resolvable:$true] %s1413
          %1419 = dma.vmem_to_hbm [thread:$0]  %s1412, 256, %s1414, %s1398, 64, 64, 4
        $region32: #{tpu_custom_call.1} parent=23 // pred_fallthru
          _
      $region24: #{tpu_custom_call.1} parent=5 // pred_fallthru
        _
      %p1420 = scmp.le.s32.totalorder 2, %s46
      // Predicated region
      $region33: #{tpu_custom_call.1} parent=5 // pred_check
        %p1421 = pneg %p1420
      $region34: #{tpu_custom_call.1} parent=5 // pred_check_branch
        %1423 = sbr.rel (%p1421) target = $region36
      $region35: #{tpu_custom_call.1} parent=5 // pred_region
        %s1424 = ssub.s32 %s46, 2
        // Predicated region
        $region37: #{tpu_custom_call.1} parent=35 // pred_check
          %p1425 = pneg %p119
        $region38: #{tpu_custom_call.1} parent=35 // pred_check_branch
          %1427 = sbr.rel (%p1425) target = $region40
        $region39: #{tpu_custom_call.1} parent=35 // pred_region
          %s1428 = sand.u32 %s104, 1
          %s1429 = scalar_lea.sflag [#allocation10], %s1428
          %s1430 = sand.u32 %s104, 1
          %s1431 = smul.addr %s1430, 16
          %s1432 = scalar_lea.vmem [#allocation11], %s1431
          %1434 = dma.done %s1429, 256
        $region40: #{tpu_custom_call.1} parent=35 // pred_fallthru
          _
      $region36: #{tpu_custom_call.1} parent=5 // pred_fallthru
        _
    $region6: #{tpu_custom_call.1} parent=1 // loop_footer
      %s50 = sadd.s32 1, %s46
    $region7: #{tpu_custom_call.1} parent=1 // loop_footer_branch
      %45 = sbr.rel target = $region3
    $region8: #{tpu_custom_call.1} parent=1 // loop_exit
      _
    %1435 = vsyncpa [#allocation9], 1
    %s1436 = scalar_lea.sflag [#allocation9], 1
    %1437 = vsyncpa %s1436, 1
    %1438 = vsyncpa [#allocation10], 1
    %s1439 = scalar_lea.sflag [#allocation10], 1
    %1440 = vsyncpa %s1439, 1

</llo_original>
